<compile_context>
chip_gen: v7x
topology: tpu7x:2x2x1
jax: 0.10.0
libtpu: 0.0.40
codegen_flags: <defaults>
</compile_context>

<pallas_src>
import functools

import jax
import jax.numpy as jnp
from jax.experimental import pallas as pl
from jax.experimental.pallas import tpu as pltpu  # noqa: F401  (TPU backend namespace)


def _round_up(v, m):
    return ((v + m - 1) // m) * m


def _lstm_encoder_kernel(x_ref, wih_ref, whh_ref, b_ref, h_out_ref, *, seq_len, hp):
    """Full LSTM recurrence in one kernel invocation.

    x_ref:     (seq_len, n_features)  VMEM
    wih_ref:   (n_features, 4*Hp)     VMEM  gate order (i, f, o, g), each gate padded to Hp lanes
    whh_ref:   (Hp, 4*Hp)             VMEM  padded rows/cols are zero
    b_ref:     (1, 4*Hp)              VMEM  b_ih + b_hh, padded lanes zero
    h_out_ref: (1, Hp)                VMEM  final hidden state (padded lanes are exactly 0)
    """
    Hp = hp
    wih = wih_ref[...]
    whh = whh_ref[...]
    b = b_ref[...]

    # Hoisted input projection: one matmul for the whole sequence, outside the serial chain.
    xg = jnp.dot(x_ref[...], wih, preferred_element_type=jnp.float32) + b  # (seq_len, 4*Hp)

    h = jnp.zeros((1, Hp), jnp.float32)
    c = jnp.zeros((1, Hp), jnp.float32)

    # Fully unrolled recurrence (seq_len is static and small).
    for t in range(seq_len):
        gates = jnp.dot(h, whh, preferred_element_type=jnp.float32) + xg[t:t + 1, :]  # (1, 4*Hp)
        # Gate order is (i, f, o, g): one sigmoid over the contiguous i|f|o region, one tanh for g.
        sig = jax.nn.sigmoid(gates[:, : 3 * Hp])
        g_g = jnp.tanh(gates[:, 3 * Hp:])
        i_g = sig[:, 0 * Hp:1 * Hp]
        f_g = sig[:, 1 * Hp:2 * Hp]
        o_g = sig[:, 2 * Hp:3 * Hp]
        c = f_g * c + i_g * g_g
        h = o_g * jnp.tanh(c)

    h_out_ref[...] = h


def encoder_forward(x, w_ih, w_hh, b_ih, b_hh, *, seq_len, n_features, latent_dim):
    """Mirrors Encoder.forward. x may be any shape with seq_len*n_features elements."""
    assert n_features == 1, "PyTorch module's final reshape requires n_features == 1"
    H = latent_dim
    Hp = _round_up(H, 128)  # per-gate lane padding -> aligned vreg-sized gate slices

    x2d = jnp.reshape(x, (seq_len, n_features)).astype(jnp.float32)

    w_ih = jnp.asarray(w_ih, jnp.float32)   # (4H, n_features), PyTorch gate order (i, f, g, o)
    w_hh = jnp.asarray(w_hh, jnp.float32)   # (4H, H)
    bias = jnp.asarray(b_ih, jnp.float32) + jnp.asarray(b_hh, jnp.float32)  # (4H,)

    def gate_blocks(w):
        return [w[k * H:(k + 1) * H] for k in range(4)]

    order = (0, 1, 3, 2)  # reorder (i, f, g, o) -> (i, f, o, g): sigmoid gates contiguous

    wih_g = gate_blocks(w_ih)                    # 4 x (H, n_features)
    whh_g = gate_blocks(w_hh)                    # 4 x (H, H)
    b_g = gate_blocks(bias)                      # 4 x (H,)

    def pack(blocks, rows, row_pad):
        # blocks: list of 4 arrays (rows, H) -> (row_pad, 4*Hp); padded entries are zero.
        cols = [jnp.pad(blk, ((0, 0), (0, Hp - H))) for blk in blocks]
        out = jnp.concatenate(cols, axis=1)
        return jnp.pad(out, ((0, row_pad - rows), (0, 0)))

    wih_p = pack([wih_g[k].T for k in order], n_features, n_features)      # (n_features, 4*Hp)
    whh_p = pack([whh_g[k].T for k in order], H, Hp)                        # (Hp, 4*Hp)
    bias_p = pack([b_g[k].reshape(1, H) for k in order], 1, 1)              # (1, 4*Hp)

    kernel = functools.partial(_lstm_encoder_kernel, seq_len=seq_len, hp=Hp)

    h_T = pl.pallas_call(
        kernel,
        out_shape=jax.ShapeDtypeStruct((1, Hp), jnp.float32),
        in_specs=[
            pl.BlockSpec(x2d.shape, lambda: (0, 0)),
            pl.BlockSpec(wih_p.shape, lambda: (0, 0)),
            pl.BlockSpec(whh_p.shape, lambda: (0, 0)),
            pl.BlockSpec(bias_p.shape, lambda: (0, 0)),
        ],
        out_specs=pl.BlockSpec((1, Hp), lambda: (0, 0)),
    )(x2d, wih_p, whh_p, bias_p)

    return jnp.reshape(h_T[:, :H], (n_features, latent_dim))


def _reference_forward(x, w_ih, w_hh, b_ih, b_hh, *, seq_len, n_features, latent_dim):
    """Pure-JAX reference LSTM (matches PyTorch nn.LSTM semantics, gate order i,f,g,o)."""
    x2d = jnp.reshape(x, (seq_len, n_features)).astype(jnp.float32)
    H = latent_dim
    h = jnp.zeros((1, H), jnp.float32)
    c = jnp.zeros((1, H), jnp.float32)
    for t in range(seq_len):
        x_t = x2d[t:t + 1, :]
        gates = x_t @ w_ih.T + h @ w_hh.T + b_ih + b_hh
        i_g = jax.nn.sigmoid(gates[:, 0 * H:1 * H])
        f_g = jax.nn.sigmoid(gates[:, 1 * H:2 * H])
        g_g = jnp.tanh(gates[:, 2 * H:3 * H])
        o_g = jax.nn.sigmoid(gates[:, 3 * H:4 * H])
        c = f_g * c + i_g * g_g
        h = o_g * jnp.tanh(c)
    return jnp.reshape(h, (n_features, latent_dim))


if __name__ == "__main__":
    # Shapes consistent with the module's forward: n_features=1 (required by the final
    # reshape), seq_len=8, latent_dim=20 (default).
    n_features, seq_len, latent_dim = 1, 8, 20

    key = jax.random.PRNGKey(0)
    k_x, k_wih, k_whh, k_bih, k_bhh = jax.random.split(key, 5)

    # Deterministic synthetic parameters (PyTorch LSTM param shapes, gate order i,f,g,o).
    scale = 1.0 / jnp.sqrt(jnp.float32(latent_dim))
    w_ih = jax.random.uniform(k_wih, (4 * latent_dim, n_features), jnp.float32, -scale, scale)
    w_hh = jax.random.uniform(k_whh, (4 * latent_dim, latent_dim), jnp.float32, -scale, scale)
    b_ih = jax.random.uniform(k_bih, (4 * latent_dim,), jnp.float32, -scale, scale)
    b_hh = jax.random.uniform(k_bhh, (4 * latent_dim,), jnp.float32, -scale, scale)

    x = jax.random.normal(k_x, (seq_len, n_features), jnp.float32)

    out = encoder_forward(
        x, w_ih, w_hh, b_ih, b_hh,
        seq_len=seq_len, n_features=n_features, latent_dim=latent_dim,
    )
    out = jax.block_until_ready(out)

    ref = _reference_forward(
        x, w_ih, w_hh, b_ih, b_hh,
        seq_len=seq_len, n_features=n_features, latent_dim=latent_dim,
    )
    assert out.shape == (n_features, latent_dim)
    assert jnp.allclose(out, ref, atol=1e-5, rtol=1e-5)

    print("KERNEL_OK")
</pallas_src>

<mosaic_0001>
module attributes {stable_mosaic.version = 11 : i64} {
  func.func @_lstm_encoder_kernel(%arg0: memref<8x1xf32, #tpu.memory_space<vmem>>, %arg1: memref<1x512xf32, #tpu.memory_space<vmem>>, %arg2: memref<128x512xf32, #tpu.memory_space<vmem>>, %arg3: memref<1x512xf32, #tpu.memory_space<vmem>>, %arg4: memref<1x128xf32, #tpu.memory_space<vmem>>) attributes {dimension_semantics = [], scalar_prefetch = 0 : i64, scratch_operands = 0 : i64, tpu.core_type = #tpu.core_type<tc>} {
    %c0 = arith.constant 0 : index
    %c0_0 = arith.constant 0 : index
    %0 = vector.load %arg1[%c0, %c0_0] : memref<1x512xf32, #tpu.memory_space<vmem>>, vector<1x512xf32>
    %c0_1 = arith.constant 0 : index
    %c0_2 = arith.constant 0 : index
    %1 = vector.load %arg2[%c0_1, %c0_2] : memref<128x512xf32, #tpu.memory_space<vmem>>, vector<128x512xf32>
    %c0_3 = arith.constant 0 : index
    %c0_4 = arith.constant 0 : index
    %2 = vector.load %arg3[%c0_3, %c0_4] : memref<1x512xf32, #tpu.memory_space<vmem>>, vector<1x512xf32>
    %c0_5 = arith.constant 0 : index
    %c0_6 = arith.constant 0 : index
    %3 = vector.load %arg0[%c0_5, %c0_6] : memref<8x1xf32, #tpu.memory_space<vmem>>, vector<8x1xf32>
    %cst = arith.constant dense<0.000000e+00> : vector<8x512xf32>
    %4 = tpu.matmul %3, %0, %cst {dimension_numbers = #tpu.dot_dimension_numbers<[1], [0], [0], [1], [0, 0, 1, 1], [], []>} : vector<8x1xf32>, vector<1x512xf32>, vector<8x512xf32> -> vector<8x512xf32>
    %5 = vector.broadcast %2 : vector<1x512xf32> to vector<8x512xf32>
    %6 = arith.addf %4, %5 : vector<8x512xf32>
    %cst_7 = arith.constant 0.000000e+00 : f32
    %7 = vector.broadcast %cst_7 : f32 to vector<1x128xf32>
    %cst_8 = arith.constant 0.000000e+00 : f32
    %8 = vector.broadcast %cst_8 : f32 to vector<1x128xf32>
    %cst_9 = arith.constant dense<0.000000e+00> : vector<1x512xf32>
    %9 = tpu.matmul %7, %1, %cst_9 {dimension_numbers = #tpu.dot_dimension_numbers<[1], [0], [0], [1], [0, 0, 1, 1], [], []>} : vector<1x128xf32>, vector<128x512xf32>, vector<1x512xf32> -> vector<1x512xf32>
    %10 = vector.extract_strided_slice %6 {offsets = [0, 0], sizes = [1, 512], strides = [1, 1]} : vector<8x512xf32> to vector<1x512xf32>
    %11 = arith.addf %9, %10 : vector<1x512xf32>
    %12 = vector.extract_strided_slice %11 {offsets = [0, 0], sizes = [1, 384], strides = [1, 1]} : vector<1x512xf32> to vector<1x384xf32>
    %13 = arith.negf %12 : vector<1x384xf32>
    %14 = math.exp %13 : vector<1x384xf32>
    %cst_10 = arith.constant 1.000000e+00 : f32
    %15 = vector.broadcast %cst_10 : f32 to vector<1x384xf32>
    %16 = arith.addf %15, %14 : vector<1x384xf32>
    %17 = arith.divf %15, %16 : vector<1x384xf32>
    %18 = vector.extract_strided_slice %11 {offsets = [0, 384], sizes = [1, 128], strides = [1, 1]} : vector<1x512xf32> to vector<1x128xf32>
    %19 = math.tanh %18 : vector<1x128xf32>
    %20 = vector.extract_strided_slice %17 {offsets = [0, 0], sizes = [1, 128], strides = [1, 1]} : vector<1x384xf32> to vector<1x128xf32>
    %21 = vector.extract_strided_slice %17 {offsets = [0, 128], sizes = [1, 128], strides = [1, 1]} : vector<1x384xf32> to vector<1x128xf32>
    %22 = vector.extract_strided_slice %17 {offsets = [0, 256], sizes = [1, 128], strides = [1, 1]} : vector<1x384xf32> to vector<1x128xf32>
    %23 = arith.mulf %21, %8 : vector<1x128xf32>
    %24 = arith.mulf %20, %19 : vector<1x128xf32>
    %25 = arith.addf %23, %24 : vector<1x128xf32>
    %26 = math.tanh %25 : vector<1x128xf32>
    %27 = arith.mulf %22, %26 : vector<1x128xf32>
    %cst_11 = arith.constant dense<0.000000e+00> : vector<1x512xf32>
    %28 = tpu.matmul %27, %1, %cst_11 {dimension_numbers = #tpu.dot_dimension_numbers<[1], [0], [0], [1], [0, 0, 1, 1], [], []>} : vector<1x128xf32>, vector<128x512xf32>, vector<1x512xf32> -> vector<1x512xf32>
    %29 = vector.extract_strided_slice %6 {offsets = [1, 0], sizes = [1, 512], strides = [1, 1]} : vector<8x512xf32> to vector<1x512xf32>
    %30 = arith.addf %28, %29 : vector<1x512xf32>
    %31 = vector.extract_strided_slice %30 {offsets = [0, 0], sizes = [1, 384], strides = [1, 1]} : vector<1x512xf32> to vector<1x384xf32>
    %32 = arith.negf %31 : vector<1x384xf32>
    %33 = math.exp %32 : vector<1x384xf32>
    %cst_12 = arith.constant 1.000000e+00 : f32
    %34 = vector.broadcast %cst_12 : f32 to vector<1x384xf32>
    %35 = arith.addf %34, %33 : vector<1x384xf32>
    %36 = arith.divf %34, %35 : vector<1x384xf32>
    %37 = vector.extract_strided_slice %30 {offsets = [0, 384], sizes = [1, 128], strides = [1, 1]} : vector<1x512xf32> to vector<1x128xf32>
    %38 = math.tanh %37 : vector<1x128xf32>
    %39 = vector.extract_strided_slice %36 {offsets = [0, 0], sizes = [1, 128], strides = [1, 1]} : vector<1x384xf32> to vector<1x128xf32>
    %40 = vector.extract_strided_slice %36 {offsets = [0, 128], sizes = [1, 128], strides = [1, 1]} : vector<1x384xf32> to vector<1x128xf32>
    %41 = vector.extract_strided_slice %36 {offsets = [0, 256], sizes = [1, 128], strides = [1, 1]} : vector<1x384xf32> to vector<1x128xf32>
    %42 = arith.mulf %40, %25 : vector<1x128xf32>
    %43 = arith.mulf %39, %38 : vector<1x128xf32>
    %44 = arith.addf %42, %43 : vector<1x128xf32>
    %45 = math.tanh %44 : vector<1x128xf32>
    %46 = arith.mulf %41, %45 : vector<1x128xf32>
    %cst_13 = arith.constant dense<0.000000e+00> : vector<1x512xf32>
    %47 = tpu.matmul %46, %1, %cst_13 {dimension_numbers = #tpu.dot_dimension_numbers<[1], [0], [0], [1], [0, 0, 1, 1], [], []>} : vector<1x128xf32>, vector<128x512xf32>, vector<1x512xf32> -> vector<1x512xf32>
    %48 = vector.extract_strided_slice %6 {offsets = [2, 0], sizes = [1, 512], strides = [1, 1]} : vector<8x512xf32> to vector<1x512xf32>
    %49 = arith.addf %47, %48 : vector<1x512xf32>
    %50 = vector.extract_strided_slice %49 {offsets = [0, 0], sizes = [1, 384], strides = [1, 1]} : vector<1x512xf32> to vector<1x384xf32>
    %51 = arith.negf %50 : vector<1x384xf32>
    %52 = math.exp %51 : vector<1x384xf32>
    %cst_14 = arith.constant 1.000000e+00 : f32
    %53 = vector.broadcast %cst_14 : f32 to vector<1x384xf32>
    %54 = arith.addf %53, %52 : vector<1x384xf32>
    %55 = arith.divf %53, %54 : vector<1x384xf32>
    %56 = vector.extract_strided_slice %49 {offsets = [0, 384], sizes = [1, 128], strides = [1, 1]} : vector<1x512xf32> to vector<1x128xf32>
    %57 = math.tanh %56 : vector<1x128xf32>
    %58 = vector.extract_strided_slice %55 {offsets = [0, 0], sizes = [1, 128], strides = [1, 1]} : vector<1x384xf32> to vector<1x128xf32>
    %59 = vector.extract_strided_slice %55 {offsets = [0, 128], sizes = [1, 128], strides = [1, 1]} : vector<1x384xf32> to vector<1x128xf32>
    %60 = vector.extract_strided_slice %55 {offsets = [0, 256], sizes = [1, 128], strides = [1, 1]} : vector<1x384xf32> to vector<1x128xf32>
    %61 = arith.mulf %59, %44 : vector<1x128xf32>
    %62 = arith.mulf %58, %57 : vector<1x128xf32>
    %63 = arith.addf %61, %62 : vector<1x128xf32>
    %64 = math.tanh %63 : vector<1x128xf32>
    %65 = arith.mulf %60, %64 : vector<1x128xf32>
    %cst_15 = arith.constant dense<0.000000e+00> : vector<1x512xf32>
    %66 = tpu.matmul %65, %1, %cst_15 {dimension_numbers = #tpu.dot_dimension_numbers<[1], [0], [0], [1], [0, 0, 1, 1], [], []>} : vector<1x128xf32>, vector<128x512xf32>, vector<1x512xf32> -> vector<1x512xf32>
    %67 = vector.extract_strided_slice %6 {offsets = [3, 0], sizes = [1, 512], strides = [1, 1]} : vector<8x512xf32> to vector<1x512xf32>
    %68 = arith.addf %66, %67 : vector<1x512xf32>
    %69 = vector.extract_strided_slice %68 {offsets = [0, 0], sizes = [1, 384], strides = [1, 1]} : vector<1x512xf32> to vector<1x384xf32>
    %70 = arith.negf %69 : vector<1x384xf32>
    %71 = math.exp %70 : vector<1x384xf32>
    %cst_16 = arith.constant 1.000000e+00 : f32
    %72 = vector.broadcast %cst_16 : f32 to vector<1x384xf32>
    %73 = arith.addf %72, %71 : vector<1x384xf32>
    %74 = arith.divf %72, %73 : vector<1x384xf32>
    %75 = vector.extract_strided_slice %68 {offsets = [0, 384], sizes = [1, 128], strides = [1, 1]} : vector<1x512xf32> to vector<1x128xf32>
    %76 = math.tanh %75 : vector<1x128xf32>
    %77 = vector.extract_strided_slice %74 {offsets = [0, 0], sizes = [1, 128], strides = [1, 1]} : vector<1x384xf32> to vector<1x128xf32>
    %78 = vector.extract_strided_slice %74 {offsets = [0, 128], sizes = [1, 128], strides = [1, 1]} : vector<1x384xf32> to vector<1x128xf32>
    %79 = vector.extract_strided_slice %74 {offsets = [0, 256], sizes = [1, 128], strides = [1, 1]} : vector<1x384xf32> to vector<1x128xf32>
    %80 = arith.mulf %78, %63 : vector<1x128xf32>
    %81 = arith.mulf %77, %76 : vector<1x128xf32>
    %82 = arith.addf %80, %81 : vector<1x128xf32>
    %83 = math.tanh %82 : vector<1x128xf32>
    %84 = arith.mulf %79, %83 : vector<1x128xf32>
    %cst_17 = arith.constant dense<0.000000e+00> : vector<1x512xf32>
    %85 = tpu.matmul %84, %1, %cst_17 {dimension_numbers = #tpu.dot_dimension_numbers<[1], [0], [0], [1], [0, 0, 1, 1], [], []>} : vector<1x128xf32>, vector<128x512xf32>, vector<1x512xf32> -> vector<1x512xf32>
    %86 = vector.extract_strided_slice %6 {offsets = [4, 0], sizes = [1, 512], strides = [1, 1]} : vector<8x512xf32> to vector<1x512xf32>
    %87 = arith.addf %85, %86 : vector<1x512xf32>
    %88 = vector.extract_strided_slice %87 {offsets = [0, 0], sizes = [1, 384], strides = [1, 1]} : vector<1x512xf32> to vector<1x384xf32>
    %89 = arith.negf %88 : vector<1x384xf32>
    %90 = math.exp %89 : vector<1x384xf32>
    %cst_18 = arith.constant 1.000000e+00 : f32
    %91 = vector.broadcast %cst_18 : f32 to vector<1x384xf32>
    %92 = arith.addf %91, %90 : vector<1x384xf32>
    %93 = arith.divf %91, %92 : vector<1x384xf32>
    %94 = vector.extract_strided_slice %87 {offsets = [0, 384], sizes = [1, 128], strides = [1, 1]} : vector<1x512xf32> to vector<1x128xf32>
    %95 = math.tanh %94 : vector<1x128xf32>
    %96 = vector.extract_strided_slice %93 {offsets = [0, 0], sizes = [1, 128], strides = [1, 1]} : vector<1x384xf32> to vector<1x128xf32>
    %97 = vector.extract_strided_slice %93 {offsets = [0, 128], sizes = [1, 128], strides = [1, 1]} : vector<1x384xf32> to vector<1x128xf32>
    %98 = vector.extract_strided_slice %93 {offsets = [0, 256], sizes = [1, 128], strides = [1, 1]} : vector<1x384xf32> to vector<1x128xf32>
    %99 = arith.mulf %97, %82 : vector<1x128xf32>
    %100 = arith.mulf %96, %95 : vector<1x128xf32>
    %101 = arith.addf %99, %100 : vector<1x128xf32>
    %102 = math.tanh %101 : vector<1x128xf32>
    %103 = arith.mulf %98, %102 : vector<1x128xf32>
    %cst_19 = arith.constant dense<0.000000e+00> : vector<1x512xf32>
    %104 = tpu.matmul %103, %1, %cst_19 {dimension_numbers = #tpu.dot_dimension_numbers<[1], [0], [0], [1], [0, 0, 1, 1], [], []>} : vector<1x128xf32>, vector<128x512xf32>, vector<1x512xf32> -> vector<1x512xf32>
    %105 = vector.extract_strided_slice %6 {offsets = [5, 0], sizes = [1, 512], strides = [1, 1]} : vector<8x512xf32> to vector<1x512xf32>
    %106 = arith.addf %104, %105 : vector<1x512xf32>
    %107 = vector.extract_strided_slice %106 {offsets = [0, 0], sizes = [1, 384], strides = [1, 1]} : vector<1x512xf32> to vector<1x384xf32>
    %108 = arith.negf %107 : vector<1x384xf32>
    %109 = math.exp %108 : vector<1x384xf32>
    %cst_20 = arith.constant 1.000000e+00 : f32
    %110 = vector.broadcast %cst_20 : f32 to vector<1x384xf32>
    %111 = arith.addf %110, %109 : vector<1x384xf32>
    %112 = arith.divf %110, %111 : vector<1x384xf32>
    %113 = vector.extract_strided_slice %106 {offsets = [0, 384], sizes = [1, 128], strides = [1, 1]} : vector<1x512xf32> to vector<1x128xf32>
    %114 = math.tanh %113 : vector<1x128xf32>
    %115 = vector.extract_strided_slice %112 {offsets = [0, 0], sizes = [1, 128], strides = [1, 1]} : vector<1x384xf32> to vector<1x128xf32>
    %116 = vector.extract_strided_slice %112 {offsets = [0, 128], sizes = [1, 128], strides = [1, 1]} : vector<1x384xf32> to vector<1x128xf32>
    %117 = vector.extract_strided_slice %112 {offsets = [0, 256], sizes = [1, 128], strides = [1, 1]} : vector<1x384xf32> to vector<1x128xf32>
    %118 = arith.mulf %116, %101 : vector<1x128xf32>
    %119 = arith.mulf %115, %114 : vector<1x128xf32>
    %120 = arith.addf %118, %119 : vector<1x128xf32>
    %121 = math.tanh %120 : vector<1x128xf32>
    %122 = arith.mulf %117, %121 : vector<1x128xf32>
    %cst_21 = arith.constant dense<0.000000e+00> : vector<1x512xf32>
    %123 = tpu.matmul %122, %1, %cst_21 {dimension_numbers = #tpu.dot_dimension_numbers<[1], [0], [0], [1], [0, 0, 1, 1], [], []>} : vector<1x128xf32>, vector<128x512xf32>, vector<1x512xf32> -> vector<1x512xf32>
    %124 = vector.extract_strided_slice %6 {offsets = [6, 0], sizes = [1, 512], strides = [1, 1]} : vector<8x512xf32> to vector<1x512xf32>
    %125 = arith.addf %123, %124 : vector<1x512xf32>
    %126 = vector.extract_strided_slice %125 {offsets = [0, 0], sizes = [1, 384], strides = [1, 1]} : vector<1x512xf32> to vector<1x384xf32>
    %127 = arith.negf %126 : vector<1x384xf32>
    %128 = math.exp %127 : vector<1x384xf32>
    %cst_22 = arith.constant 1.000000e+00 : f32
    %129 = vector.broadcast %cst_22 : f32 to vector<1x384xf32>
    %130 = arith.addf %129, %128 : vector<1x384xf32>
    %131 = arith.divf %129, %130 : vector<1x384xf32>
    %132 = vector.extract_strided_slice %125 {offsets = [0, 384], sizes = [1, 128], strides = [1, 1]} : vector<1x512xf32> to vector<1x128xf32>
    %133 = math.tanh %132 : vector<1x128xf32>
    %134 = vector.extract_strided_slice %131 {offsets = [0, 0], sizes = [1, 128], strides = [1, 1]} : vector<1x384xf32> to vector<1x128xf32>
    %135 = vector.extract_strided_slice %131 {offsets = [0, 128], sizes = [1, 128], strides = [1, 1]} : vector<1x384xf32> to vector<1x128xf32>
    %136 = vector.extract_strided_slice %131 {offsets = [0, 256], sizes = [1, 128], strides = [1, 1]} : vector<1x384xf32> to vector<1x128xf32>
    %137 = arith.mulf %135, %120 : vector<1x128xf32>
    %138 = arith.mulf %134, %133 : vector<1x128xf32>
    %139 = arith.addf %137, %138 : vector<1x128xf32>
    %140 = math.tanh %139 : vector<1x128xf32>
    %141 = arith.mulf %136, %140 : vector<1x128xf32>
    %cst_23 = arith.constant dense<0.000000e+00> : vector<1x512xf32>
    %142 = tpu.matmul %141, %1, %cst_23 {dimension_numbers = #tpu.dot_dimension_numbers<[1], [0], [0], [1], [0, 0, 1, 1], [], []>} : vector<1x128xf32>, vector<128x512xf32>, vector<1x512xf32> -> vector<1x512xf32>
    %143 = vector.extract_strided_slice %6 {offsets = [7, 0], sizes = [1, 512], strides = [1, 1]} : vector<8x512xf32> to vector<1x512xf32>
    %144 = arith.addf %142, %143 : vector<1x512xf32>
    %145 = vector.extract_strided_slice %144 {offsets = [0, 0], sizes = [1, 384], strides = [1, 1]} : vector<1x512xf32> to vector<1x384xf32>
    %146 = arith.negf %145 : vector<1x384xf32>
    %147 = math.exp %146 : vector<1x384xf32>
    %cst_24 = arith.constant 1.000000e+00 : f32
    %148 = vector.broadcast %cst_24 : f32 to vector<1x384xf32>
    %149 = arith.addf %148, %147 : vector<1x384xf32>
    %150 = arith.divf %148, %149 : vector<1x384xf32>
    %151 = vector.extract_strided_slice %144 {offsets = [0, 384], sizes = [1, 128], strides = [1, 1]} : vector<1x512xf32> to vector<1x128xf32>
    %152 = math.tanh %151 : vector<1x128xf32>
    %153 = vector.extract_strided_slice %150 {offsets = [0, 0], sizes = [1, 128], strides = [1, 1]} : vector<1x384xf32> to vector<1x128xf32>
    %154 = vector.extract_strided_slice %150 {offsets = [0, 128], sizes = [1, 128], strides = [1, 1]} : vector<1x384xf32> to vector<1x128xf32>
    %155 = vector.extract_strided_slice %150 {offsets = [0, 256], sizes = [1, 128], strides = [1, 1]} : vector<1x384xf32> to vector<1x128xf32>
    %156 = arith.mulf %154, %139 : vector<1x128xf32>
    %157 = arith.mulf %153, %152 : vector<1x128xf32>
    %158 = arith.addf %156, %157 : vector<1x128xf32>
    %159 = math.tanh %158 : vector<1x128xf32>
    %160 = arith.mulf %155, %159 : vector<1x128xf32>
    %c0_25 = arith.constant 0 : index
    %c0_26 = arith.constant 0 : index
    %161 = vector.load %arg4[%c0_25, %c0_26] : memref<1x128xf32, #tpu.memory_space<vmem>>, vector<1x128xf32>
    tpu.vector_store %arg4[%c0_25, %c0_26], %160 {strides = array<i32>} : memref<1x128xf32, #tpu.memory_space<vmem>>, vector<1x128xf32>,
    return
  }
}

</mosaic_0001>

<llo_original>
// kernel: tpu_custom_call.1
$region0: #{tpu_custom_call.1}
  #allocation0 [shape = 'u32[]', space=smem, size = 0x4, offset = 0x4, fixed_abs, tag = 'smem constant byte address 0x4 - core index']
  #allocation1 [shape = 'u32[144,128]{1,0:T(1,128)}', space=vmem, size = 0x12000, scoped, tag = 'internal scratch']
  %s0 = inlined_call_operand.vmem [shape: f32[8,1], index: 0, kind: input, shape index: {}]
  %s1 = inlined_call_operand.vmem [shape: f32[1,512], index: 1, kind: input, shape index: {}]
  %s2 = inlined_call_operand.hbm [shape: f32[128,512], index: 2, kind: input, shape index: {}]
  %s3 = inlined_call_operand.vmem [shape: f32[1,512], index: 3, kind: input, shape index: {}]
  %s4 = inlined_call_operand.hbm [shape: f32[1,128], index: 4, kind: output, shape index: {}]
  %s5 = sld [smem:[#allocation0]]
  $region30: #{tpu_custom_call.1} parent=0
    _
  %s7 = ssub.s32 1, %s5
  %s8 = scalar_select 0, %s7, %s5
  $region1: #{tpu_custom_call.1} parent=0
    #allocation2 [shape = 'u8[262144]{0}', space=vmem, size = 0x40000, scoped, tag = 'input window, operand 2, single buffered']
    #allocation3 [shape = 's32[1]{0}', space=sflag, size = 0x4, scoped, tag = 'scoped memory for tpu_custom_call.1']
    #allocation4 [shape = 's32[1]{0}', space=sflag, size = 0x4, scoped, tag = 'scoped memory for tpu_custom_call.1']
    #allocation5 [shape = 'u8[512]{0}', space=vmem, size = 0x400, scoped, tag = 'output window, operand 0, single buffered']
    %9 = vsyncpa [#allocation3], 0
    %10 = vsyncpa [#allocation4], 0
    // Predicated region
    $region2: #{tpu_custom_call.1} parent=1 // pred_check
      _
    $region3: #{tpu_custom_call.1} parent=1 // pred_check_branch
      %12 = sbr.rel (0) target = $region5
    $region4: #{tpu_custom_call.1} parent=1 // pred_region
      _
    $region5: #{tpu_custom_call.1} parent=1 // pred_fallthru
      _
    // Predicated region
    $region6: #{tpu_custom_call.1} parent=1 // pred_check
      _
    $region7: #{tpu_custom_call.1} parent=1 // pred_check_branch
      %14 = sbr.rel (0) target = $region9
    $region8: #{tpu_custom_call.1} parent=1 // pred_region
      _
    $region9: #{tpu_custom_call.1} parent=1 // pred_fallthru
      _
    // Predicated region
    $region10: #{tpu_custom_call.1} parent=1 // pred_check
      _
    $region11: #{tpu_custom_call.1} parent=1 // pred_check_branch
      %16 = sbr.rel (0) target = $region13
    $region12: #{tpu_custom_call.1} parent=1 // pred_region
      %s18 = ssub.s32 8192, 8192
      %19 = vsyncadd [#allocation3], %s18
      %s20 = sshll.u32 [#allocation2], 4
      %s21 = int_to_ptr.vmem [resolvable:$true] %s20
      %26 = dma.hbm_to_vmem [thread:$0]  %s2, 8192, %s21, [#allocation3], 512, 512, 32
    $region13: #{tpu_custom_call.1} parent=1 // pred_fallthru
      _
    // Predicated region
    $region14: #{tpu_custom_call.1} parent=1 // pred_check
      _
    $region15: #{tpu_custom_call.1} parent=1 // pred_check_branch
      %28 = sbr.rel (0) target = $region17
    $region16: #{tpu_custom_call.1} parent=1 // pred_region
      _
    $region17: #{tpu_custom_call.1} parent=1 // pred_fallthru
      _
    // Predicated region
    $region18: #{tpu_custom_call.1} parent=1 // pred_check
      _
    $region19: #{tpu_custom_call.1} parent=1 // pred_check_branch
      %30 = sbr.rel (0) target = $region21
    $region20: #{tpu_custom_call.1} parent=1 // pred_region
      %31 = dma.done [#allocation3], 8192
    $region21: #{tpu_custom_call.1} parent=1 // pred_fallthru
      _
    %v32 = vld [vmem:[%s1] sm:$0xf]
    %v33 = vld [vmem:[#allocation2] sm:$0xff]
    %v34 = vld [vmem:[#allocation2 + $0x8] sm:$0xff]
    %v35 = vld [vmem:[#allocation2 + $0x10] sm:$0xff]
    %v36 = vld [vmem:[#allocation2 + $0x18] sm:$0xff]
    %v37 = vld [vmem:[#allocation2 + $0x20] sm:$0xff]
    %v38 = vld [vmem:[#allocation2 + $0x28] sm:$0xff]
    %v39 = vld [vmem:[#allocation2 + $0x30] sm:$0xff]
    %v40 = vld [vmem:[#allocation2 + $0x38] sm:$0xff]
    %v41 = vld [vmem:[#allocation2 + $0x40] sm:$0xff]
    %v42 = vld [vmem:[#allocation2 + $0x48] sm:$0xff]
    %v43 = vld [vmem:[#allocation2 + $0x50] sm:$0xff]
    %v44 = vld [vmem:[#allocation2 + $0x58] sm:$0xff]
    %v45 = vld [vmem:[#allocation2 + $0x60] sm:$0xff]
    %v46 = vld [vmem:[#allocation2 + $0x68] sm:$0xff]
    %v47 = vld [vmem:[#allocation2 + $0x70] sm:$0xff]
    %v48 = vld [vmem:[#allocation2 + $0x78] sm:$0xff]
    %v49 = vld [vmem:[#allocation2 + $0x80] sm:$0xff]
    %v50 = vld [vmem:[#allocation2 + $0x88] sm:$0xff]
    %v51 = vld [vmem:[#allocation2 + $0x90] sm:$0xff]
    %v52 = vld [vmem:[#allocation2 + $0x98] sm:$0xff]
    %v53 = vld [vmem:[#allocation2 + $0xa0] sm:$0xff]
    %v54 = vld [vmem:[#allocation2 + $0xa8] sm:$0xff]
    %v55 = vld [vmem:[#allocation2 + $0xb0] sm:$0xff]
    %v56 = vld [vmem:[#allocation2 + $0xb8] sm:$0xff]
    %v57 = vld [vmem:[#allocation2 + $0xc0] sm:$0xff]
    %v58 = vld [vmem:[#allocation2 + $0xc8] sm:$0xff]
    %v59 = vld [vmem:[#allocation2 + $0xd0] sm:$0xff]
    %v60 = vld [vmem:[#allocation2 + $0xd8] sm:$0xff]
    %v61 = vld [vmem:[#allocation2 + $0xe0] sm:$0xff]
    %v62 = vld [vmem:[#allocation2 + $0xe8] sm:$0xff]
    %v63 = vld [vmem:[#allocation2 + $0xf0] sm:$0xff]
    %v64 = vld [vmem:[#allocation2 + $0xf8] sm:$0xff]
    %v65 = vld [vmem:[#allocation2 + $0x100] sm:$0xff]
    %v66 = vld [vmem:[#allocation2 + $0x108] sm:$0xff]
    %v67 = vld [vmem:[#allocation2 + $0x110] sm:$0xff]
    %v68 = vld [vmem:[#allocation2 + $0x118] sm:$0xff]
    %v69 = vld [vmem:[#allocation2 + $0x120] sm:$0xff]
    %v70 = vld [vmem:[#allocation2 + $0x128] sm:$0xff]
    %v71 = vld [vmem:[#allocation2 + $0x130] sm:$0xff]
    %v72 = vld [vmem:[#allocation2 + $0x138] sm:$0xff]
    %v73 = vld [vmem:[#allocation2 + $0x140] sm:$0xff]
    %v74 = vld [vmem:[#allocation2 + $0x148] sm:$0xff]
    %v75 = vld [vmem:[#allocation2 + $0x150] sm:$0xff]
    %v76 = vld [vmem:[#allocation2 + $0x158] sm:$0xff]
    %v77 = vld [vmem:[#allocation2 + $0x160] sm:$0xff]
    %v78 = vld [vmem:[#allocation2 + $0x168] sm:$0xff]
    %v79 = vld [vmem:[#allocation2 + $0x170] sm:$0xff]
    %v80 = vld [vmem:[#allocation2 + $0x178] sm:$0xff]
    %v81 = vld [vmem:[#allocation2 + $0x180] sm:$0xff]
    %v82 = vld [vmem:[#allocation2 + $0x188] sm:$0xff]
    %v83 = vld [vmem:[#allocation2 + $0x190] sm:$0xff]
    %v84 = vld [vmem:[#allocation2 + $0x198] sm:$0xff]
    %v85 = vld [vmem:[#allocation2 + $0x1a0] sm:$0xff]
    %v86 = vld [vmem:[#allocation2 + $0x1a8] sm:$0xff]
    %v87 = vld [vmem:[#allocation2 + $0x1b0] sm:$0xff]
    %v88 = vld [vmem:[#allocation2 + $0x1b8] sm:$0xff]
    %v89 = vld [vmem:[#allocation2 + $0x1c0] sm:$0xff]
    %v90 = vld [vmem:[#allocation2 + $0x1c8] sm:$0xff]
    %v91 = vld [vmem:[#allocation2 + $0x1d0] sm:$0xff]
    %v92 = vld [vmem:[#allocation2 + $0x1d8] sm:$0xff]
    %v93 = vld [vmem:[#allocation2 + $0x1e0] sm:$0xff]
    %v94 = vld [vmem:[#allocation2 + $0x1e8] sm:$0xff]
    %v95 = vld [vmem:[#allocation2 + $0x1f0] sm:$0xff]
    %v96 = vld [vmem:[#allocation2 + $0x1f8] sm:$0xff]
    %v97 = vld [vmem:[%s3] sm:$0xf]
    %v98 = vld [vmem:[%s0] sm:$0xff]
    %v100 = vlaneseq
    %v101 = vshrl.u32 %v100, 7
    %v102 = vsub.s32 0, %v101
    %v103 = vrot.slane %v97, %v102
    %v104 = vlaneseq
    %v105 = vshrl.u32 %v104, 7
    %v106 = vsub.s32 1, %v105
    %v107 = vrot.slane %v97, %v106
    %v108 = vlaneseq
    %v109 = vshrl.u32 %v108, 7
    %v110 = vsub.s32 2, %v109
    %v111 = vrot.slane %v97, %v110
    %v112 = vlaneseq
    %v113 = vshrl.u32 %v112, 7
    %v114 = vsub.s32 3, %v113
    %v115 = vrot.slane %v97, %v114
    %v121 = vlaneseq
    %v122 = vshrl.u32 %v121, 7
    %v123 = vsub.s32 0, %v122
    %v124 = vrot.slane %v32, %v123
    %v125 = vlaneseq
    %v126 = vshrl.u32 %v125, 7
    %v127 = vsub.s32 1, %v126
    %v128 = vrot.slane %v32, %v127
    %v129 = vlaneseq
    %v130 = vshrl.u32 %v129, 7
    %v131 = vsub.s32 2, %v130
    %v132 = vrot.slane %v32, %v131
    %v133 = vlaneseq
    %v134 = vshrl.u32 %v133, 7
    %v135 = vsub.s32 3, %v134
    %v136 = vrot.slane %v32, %v135
    %vm137 = vcmask 7168
    %v139 = vsel %vm137, %v98, 0
    %vm141 = vcmask 1040384
    %v142 = vsel %vm141, %v124, 0
    %v144 = vsel %vm141, %v128, 0
    %v146 = vsel %vm141, %v132, 0
    %v148 = vsel %vm141, %v136, 0
    %150 = vmatprep.subr.mxu0 %v144
    %151 = vmatpush1.msra.mxu0 %v142
    %152 = vmatprep.subr.mxu0 0.0
    %153 = vmatpush1.msra.mxu0 0.0
    %154 = vmatprep.subr.mxu0 0.0
    %155 = vmatpush1.msra.mxu0 0.0
    %156 = vmatprep.subr.mxu0 0.0
    %157 = vmatpush1.msra.mxu0 0.0
    %158 = vmatprep.subr.mxu0 0.0
    %159 = vmatpush1.msra.mxu0 0.0
    %160 = vmatprep.subr.mxu0 0.0
    %161 = vmatpush1.msra.mxu0 0.0
    %162 = vmatprep.subr.mxu0 0.0
    %163 = vmatpush1.msra.mxu0 0.0
    %164 = vmatprep.subr.mxu0 0.0
    %165 = vmatpush1.msra.mxu0 0.0
    %166 = vmatprep.subr.mxu0 0.0
    %167 = vmatpush1.msra.mxu0 0.0
    %168 = vmatprep.subr.mxu0 0.0
    %169 = vmatpush1.msra.mxu0 0.0
    %170 = vmatprep.subr.mxu0 0.0
    %171 = vmatpush1.msra.mxu0 0.0
    %172 = vmatprep.subr.mxu0 0.0
    %173 = vmatpush1.msra.mxu0 0.0
    %174 = vmatprep.subr.mxu0 0.0
    %175 = vmatpush1.msra.mxu0 0.0
    %176 = vmatprep.subr.mxu0 0.0
    %177 = vmatpush1.msra.mxu0 0.0
    %178 = vmatprep.subr.mxu0 0.0
    %179 = vmatpush1.msra.mxu0 0.0
    %180 = vmatprep.subr.mxu0 0.0
    %181 = vmatpush1.msra.mxu0 0.0
    %182 = vmatprep.subr.mxu0 0.0
    %183 = vmatpush1.msra.mxu0 0.0
    %184 = vmatprep.subr.mxu0 0.0
    %185 = vmatpush1.msra.mxu0 0.0
    %186 = vmatprep.subr.mxu0 0.0
    %187 = vmatpush1.msra.mxu0 0.0
    %188 = vmatprep.subr.mxu0 0.0
    %189 = vmatpush1.msra.mxu0 0.0
    %190 = vmatprep.subr.mxu0 0.0
    %191 = vmatpush1.msra.mxu0 0.0
    %192 = vmatprep.subr.mxu0 0.0
    %193 = vmatpush1.msra.mxu0 0.0
    %194 = vmatprep.subr.mxu0 0.0
    %195 = vmatpush1.msra.mxu0 0.0
    %196 = vmatprep.subr.mxu0 0.0
    %197 = vmatpush1.msra.mxu0 0.0
    %198 = vmatprep.subr.mxu0 0.0
    %199 = vmatpush1.msra.mxu0 0.0
    %200 = vmatprep.subr.mxu0 0.0
    %201 = vmatpush1.msra.mxu0 0.0
    %202 = vmatprep.subr.mxu0 0.0
    %203 = vmatpush1.msra.mxu0 0.0
    %204 = vmatprep.subr.mxu0 0.0
    %205 = vmatpush1.msra.mxu0 0.0
    %206 = vmatprep.subr.mxu0 0.0
    %207 = vmatpush1.msra.mxu0 0.0
    %208 = vmatprep.subr.mxu0 0.0
    %209 = vmatpush1.msra.mxu0 0.0
    %210 = vmatprep.subr.mxu0 0.0
    %211 = vmatpush1.msra.mxu0 0.0
    %212 = vmatprep.subr.mxu0 0.0
    %213 = vmatpush1.msra.mxu0 0.0
    %214 = vmatprep.mubr.f32.mxu0 0.0
    %215 = vmatmul.mubr.f32.gmra.mrb[0].mxu0 %v139
    %v216 = vpop.f32.mrb[0].mxu0
    %v217 = vadd.f32 %v103, %v216
    %v218 = vpop.f32.mrb[0].mxu0
    %v219 = vadd.f32 %v107, %v218
    %220 = vdwg.mxu0
    %221 = vmatprep.subr.mxu0 %v148
    %222 = vmatpush1.msra.mxu0 %v146
    %223 = vmatprep.subr.mxu0 0.0
    %224 = vmatpush1.msra.mxu0 0.0
    %225 = vmatprep.subr.mxu0 0.0
    %226 = vmatpush1.msra.mxu0 0.0
    %227 = vmatprep.subr.mxu0 0.0
    %228 = vmatpush1.msra.mxu0 0.0
    %229 = vmatprep.subr.mxu0 0.0
    %230 = vmatpush1.msra.mxu0 0.0
    %231 = vmatprep.subr.mxu0 0.0
    %232 = vmatpush1.msra.mxu0 0.0
    %233 = vmatprep.subr.mxu0 0.0
    %234 = vmatpush1.msra.mxu0 0.0
    %235 = vmatprep.subr.mxu0 0.0
    %236 = vmatpush1.msra.mxu0 0.0
    %237 = vmatprep.subr.mxu0 0.0
    %238 = vmatpush1.msra.mxu0 0.0
    %239 = vmatprep.subr.mxu0 0.0
    %240 = vmatpush1.msra.mxu0 0.0
    %241 = vmatprep.subr.mxu0 0.0
    %242 = vmatpush1.msra.mxu0 0.0
    %243 = vmatprep.subr.mxu0 0.0
    %244 = vmatpush1.msra.mxu0 0.0
    %245 = vmatprep.subr.mxu0 0.0
    %246 = vmatpush1.msra.mxu0 0.0
    %247 = vmatprep.subr.mxu0 0.0
    %248 = vmatpush1.msra.mxu0 0.0
    %249 = vmatprep.subr.mxu0 0.0
    %250 = vmatpush1.msra.mxu0 0.0
    %251 = vmatprep.subr.mxu0 0.0
    %252 = vmatpush1.msra.mxu0 0.0
    %253 = vmatprep.subr.mxu0 0.0
    %254 = vmatpush1.msra.mxu0 0.0
    %255 = vmatprep.subr.mxu0 0.0
    %256 = vmatpush1.msra.mxu0 0.0
    %257 = vmatprep.subr.mxu0 0.0
    %258 = vmatpush1.msra.mxu0 0.0
    %259 = vmatprep.subr.mxu0 0.0
    %260 = vmatpush1.msra.mxu0 0.0
    %261 = vmatprep.subr.mxu0 0.0
    %262 = vmatpush1.msra.mxu0 0.0
    %263 = vmatprep.subr.mxu0 0.0
    %264 = vmatpush1.msra.mxu0 0.0
    %265 = vmatprep.subr.mxu0 0.0
    %266 = vmatpush1.msra.mxu0 0.0
    %267 = vmatprep.subr.mxu0 0.0
    %268 = vmatpush1.msra.mxu0 0.0
    %269 = vmatprep.subr.mxu0 0.0
    %270 = vmatpush1.msra.mxu0 0.0
    %271 = vmatprep.subr.mxu0 0.0
    %272 = vmatpush1.msra.mxu0 0.0
    %273 = vmatprep.subr.mxu0 0.0
    %274 = vmatpush1.msra.mxu0 0.0
    %275 = vmatprep.subr.mxu0 0.0
    %276 = vmatpush1.msra.mxu0 0.0
    %277 = vmatprep.subr.mxu0 0.0
    %278 = vmatpush1.msra.mxu0 0.0
    %279 = vmatprep.subr.mxu0 0.0
    %280 = vmatpush1.msra.mxu0 0.0
    %281 = vmatprep.subr.mxu0 0.0
    %282 = vmatpush1.msra.mxu0 0.0
    %283 = vmatprep.subr.mxu0 0.0
    %284 = vmatpush1.msra.mxu0 0.0
    %285 = vmatprep.mubr.f32.mxu0 0.0
    %286 = vmatmul.mubr.f32.gmra.mrb[0].mxu0 %v139
    %v287 = vpop.f32.mrb[0].mxu0
    %v288 = vadd.f32 %v111, %v287
    %v289 = vpop.f32.mrb[0].mxu0
    %v290 = vadd.f32 %v115, %v289
    %291 = vdwg.mxu0
    %292 = vmatprep.subr.mxu0 %v34
    %293 = vmatpush1.msra.mxu0 %v33
    %294 = vmatprep.subr.mxu0 %v38
    %295 = vmatpush1.msra.mxu0 %v37
    %296 = vmatprep.subr.mxu0 %v42
    %297 = vmatpush1.msra.mxu0 %v41
    %298 = vmatprep.subr.mxu0 %v46
    %299 = vmatpush1.msra.mxu0 %v45
    %300 = vmatprep.subr.mxu0 %v50
    %301 = vmatpush1.msra.mxu0 %v49
    %302 = vmatprep.subr.mxu0 %v54
    %303 = vmatpush1.msra.mxu0 %v53
    %304 = vmatprep.subr.mxu0 %v58
    %305 = vmatpush1.msra.mxu0 %v57
    %306 = vmatprep.subr.mxu0 %v62
    %307 = vmatpush1.msra.mxu0 %v61
    %308 = vmatprep.subr.mxu0 %v66
    %309 = vmatpush1.msra.mxu0 %v65
    %310 = vmatprep.subr.mxu0 %v70
    %311 = vmatpush1.msra.mxu0 %v69
    %312 = vmatprep.subr.mxu0 %v74
    %313 = vmatpush1.msra.mxu0 %v73
    %314 = vmatprep.subr.mxu0 %v78
    %315 = vmatpush1.msra.mxu0 %v77
    %316 = vmatprep.subr.mxu0 %v82
    %317 = vmatpush1.msra.mxu0 %v81
    %318 = vmatprep.subr.mxu0 %v86
    %319 = vmatpush1.msra.mxu0 %v85
    %320 = vmatprep.subr.mxu0 %v90
    %321 = vmatpush1.msra.mxu0 %v89
    %322 = vmatprep.subr.mxu0 %v94
    %323 = vmatpush1.msra.mxu0 %v93
    %324 = vmatprep.subr.mxu0 0.0
    %325 = vmatpush1.msra.mxu0 0.0
    %326 = vmatprep.subr.mxu0 0.0
    %327 = vmatpush1.msra.mxu0 0.0
    %328 = vmatprep.subr.mxu0 0.0
    %329 = vmatpush1.msra.mxu0 0.0
    %330 = vmatprep.subr.mxu0 0.0
    %331 = vmatpush1.msra.mxu0 0.0
    %332 = vmatprep.subr.mxu0 0.0
    %333 = vmatpush1.msra.mxu0 0.0
    %334 = vmatprep.subr.mxu0 0.0
    %335 = vmatpush1.msra.mxu0 0.0
    %336 = vmatprep.subr.mxu0 0.0
    %337 = vmatpush1.msra.mxu0 0.0
    %338 = vmatprep.subr.mxu0 0.0
    %339 = vmatpush1.msra.mxu0 0.0
    %340 = vmatprep.subr.mxu0 0.0
    %341 = vmatpush1.msra.mxu0 0.0
    %342 = vmatprep.subr.mxu0 0.0
    %343 = vmatpush1.msra.mxu0 0.0
    %344 = vmatprep.subr.mxu0 0.0
    %345 = vmatpush1.msra.mxu0 0.0
    %346 = vmatprep.subr.mxu0 0.0
    %347 = vmatpush1.msra.mxu0 0.0
    %348 = vmatprep.subr.mxu0 0.0
    %349 = vmatpush1.msra.mxu0 0.0
    %350 = vmatprep.subr.mxu0 0.0
    %351 = vmatpush1.msra.mxu0 0.0
    %352 = vmatprep.subr.mxu0 0.0
    %353 = vmatpush1.msra.mxu0 0.0
    %354 = vmatprep.subr.mxu0 0.0
    %355 = vmatpush1.msra.mxu0 0.0
    %356 = vmatprep.mubr.f32.mxu0 0.0
    %357 = vmatmul.mubr.f32.gmra.mrb[0].mxu0 0.0
    %v358 = vpop.f32.mrb[0].mxu0
    %v359 = vadd.f32 %v217, %v358
    %v360 = vpop.f32.mrb[0].mxu0
    %v361 = vadd.f32 %v219, %v360
    %362 = vdwg.mxu0
    %363 = vmatprep.subr.mxu0 %v36
    %364 = vmatpush1.msra.mxu0 %v35
    %365 = vmatprep.subr.mxu0 %v40
    %366 = vmatpush1.msra.mxu0 %v39
    %367 = vmatprep.subr.mxu0 %v44
    %368 = vmatpush1.msra.mxu0 %v43
    %369 = vmatprep.subr.mxu0 %v48
    %370 = vmatpush1.msra.mxu0 %v47
    %371 = vmatprep.subr.mxu0 %v52
    %372 = vmatpush1.msra.mxu0 %v51
    %373 = vmatprep.subr.mxu0 %v56
    %374 = vmatpush1.msra.mxu0 %v55
    %375 = vmatprep.subr.mxu0 %v60
    %376 = vmatpush1.msra.mxu0 %v59
    %377 = vmatprep.subr.mxu0 %v64
    %378 = vmatpush1.msra.mxu0 %v63
    %379 = vmatprep.subr.mxu0 %v68
    %380 = vmatpush1.msra.mxu0 %v67
    %381 = vmatprep.subr.mxu0 %v72
    %382 = vmatpush1.msra.mxu0 %v71
    %383 = vmatprep.subr.mxu0 %v76
    %384 = vmatpush1.msra.mxu0 %v75
    %385 = vmatprep.subr.mxu0 %v80
    %386 = vmatpush1.msra.mxu0 %v79
    %387 = vmatprep.subr.mxu0 %v84
    %388 = vmatpush1.msra.mxu0 %v83
    %389 = vmatprep.subr.mxu0 %v88
    %390 = vmatpush1.msra.mxu0 %v87
    %391 = vmatprep.subr.mxu0 %v92
    %392 = vmatpush1.msra.mxu0 %v91
    %393 = vmatprep.subr.mxu0 %v96
    %394 = vmatpush1.msra.mxu0 %v95
    %395 = vmatprep.subr.mxu0 0.0
    %396 = vmatpush1.msra.mxu0 0.0
    %397 = vmatprep.subr.mxu0 0.0
    %398 = vmatpush1.msra.mxu0 0.0
    %399 = vmatprep.subr.mxu0 0.0
    %400 = vmatpush1.msra.mxu0 0.0
    %401 = vmatprep.subr.mxu0 0.0
    %402 = vmatpush1.msra.mxu0 0.0
    %403 = vmatprep.subr.mxu0 0.0
    %404 = vmatpush1.msra.mxu0 0.0
    %405 = vmatprep.subr.mxu0 0.0
    %406 = vmatpush1.msra.mxu0 0.0
    %407 = vmatprep.subr.mxu0 0.0
    %408 = vmatpush1.msra.mxu0 0.0
    %409 = vmatprep.subr.mxu0 0.0
    %410 = vmatpush1.msra.mxu0 0.0
    %411 = vmatprep.subr.mxu0 0.0
    %412 = vmatpush1.msra.mxu0 0.0
    %413 = vmatprep.subr.mxu0 0.0
    %414 = vmatpush1.msra.mxu0 0.0
    %415 = vmatprep.subr.mxu0 0.0
    %416 = vmatpush1.msra.mxu0 0.0
    %417 = vmatprep.subr.mxu0 0.0
    %418 = vmatpush1.msra.mxu0 0.0
    %419 = vmatprep.subr.mxu0 0.0
    %420 = vmatpush1.msra.mxu0 0.0
    %421 = vmatprep.subr.mxu0 0.0
    %422 = vmatpush1.msra.mxu0 0.0
    %423 = vmatprep.subr.mxu0 0.0
    %424 = vmatpush1.msra.mxu0 0.0
    %425 = vmatprep.subr.mxu0 0.0
    %426 = vmatpush1.msra.mxu0 0.0
    %427 = vmatprep.mubr.f32.mxu0 0.0
    %428 = vmatmul.mubr.f32.gmra.mrb[0].mxu0 0.0
    %v429 = vpop.f32.mrb[0].mxu0
    %v430 = vadd.f32 %v288, %v429
    %v431 = vpop.f32.mrb[0].mxu0
    %v432 = vadd.f32 %v290, %v431
    %433 = vdwg.mxu0
    %v434 = vxor.u32 %v359, 2147483648
    %v435 = vxor.u32 %v361, 2147483648
    %v436 = vxor.u32 %v430, 2147483648
    %v437 = vmul.f32 %v434, 1.442695
    %v438 = vpow.pop %v437
    %v439 = vmul.f32 %v435, 1.442695
    %v440 = vpow.pop %v439
    %v441 = vmul.f32 %v436, 1.442695
    %v442 = vpow.pop %v441
    %v443 = vadd.f32 %v438, 1.0
    %v444 = vadd.f32 %v440, 1.0
    %v445 = vadd.f32 %v442, 1.0
    %v446 = vrcp.pop %v443
    %v447 = vmul.f32 1.0, %v446
    %v448 = vrcp.pop %v444
    %v449 = vmul.f32 1.0, %v448
    %v450 = vrcp.pop %v445
    %v451 = vmul.f32 1.0, %v450
    %v452 = vtanh.pop %v432
    %v453 = vmul.f32 %v449, 0.0
    %v454 = vmul.f32 %v447, %v452
    %v455 = vadd.f32 %v453, %v454
    %v456 = vtanh.pop %v455
    %v457 = vmul.f32 %v451, %v456
    %v462 = vrot.slane %v217, 1
    %v463 = vrot.slane %v219, 1
    %v464 = vrot.slane %v288, 1
    %v465 = vrot.slane %v290, 1
    %470 = vmatprep.subr.mxu0 %v34
    %471 = vmatpush1.msra.mxu0 %v33
    %472 = vmatprep.subr.mxu0 %v38
    %473 = vmatpush1.msra.mxu0 %v37
    %474 = vmatprep.subr.mxu0 %v42
    %475 = vmatpush1.msra.mxu0 %v41
    %476 = vmatprep.subr.mxu0 %v46
    %477 = vmatpush1.msra.mxu0 %v45
    %478 = vmatprep.subr.mxu0 %v50
    %479 = vmatpush1.msra.mxu0 %v49
    %480 = vmatprep.subr.mxu0 %v54
    %481 = vmatpush1.msra.mxu0 %v53
    %482 = vmatprep.subr.mxu0 %v58
    %483 = vmatpush1.msra.mxu0 %v57
    %484 = vmatprep.subr.mxu0 %v62
    %485 = vmatpush1.msra.mxu0 %v61
    %486 = vmatprep.subr.mxu0 %v66
    %487 = vmatpush1.msra.mxu0 %v65
    %488 = vmatprep.subr.mxu0 %v70
    %489 = vmatpush1.msra.mxu0 %v69
    %490 = vmatprep.subr.mxu0 %v74
    %491 = vmatpush1.msra.mxu0 %v73
    %492 = vmatprep.subr.mxu0 %v78
    %493 = vmatpush1.msra.mxu0 %v77
    %494 = vmatprep.subr.mxu0 %v82
    %495 = vmatpush1.msra.mxu0 %v81
    %496 = vmatprep.subr.mxu0 %v86
    %497 = vmatpush1.msra.mxu0 %v85
    %498 = vmatprep.subr.mxu0 %v90
    %499 = vmatpush1.msra.mxu0 %v89
    %500 = vmatprep.subr.mxu0 %v94
    %501 = vmatpush1.msra.mxu0 %v93
    %502 = vmatprep.subr.mxu0 0.0
    %503 = vmatpush1.msra.mxu0 0.0
    %504 = vmatprep.subr.mxu0 0.0
    %505 = vmatpush1.msra.mxu0 0.0
    %506 = vmatprep.subr.mxu0 0.0
    %507 = vmatpush1.msra.mxu0 0.0
    %508 = vmatprep.subr.mxu0 0.0
    %509 = vmatpush1.msra.mxu0 0.0
    %510 = vmatprep.subr.mxu0 0.0
    %511 = vmatpush1.msra.mxu0 0.0
    %512 = vmatprep.subr.mxu0 0.0
    %513 = vmatpush1.msra.mxu0 0.0
    %514 = vmatprep.subr.mxu0 0.0
    %515 = vmatpush1.msra.mxu0 0.0
    %516 = vmatprep.subr.mxu0 0.0
    %517 = vmatpush1.msra.mxu0 0.0
    %518 = vmatprep.subr.mxu0 0.0
    %519 = vmatpush1.msra.mxu0 0.0
    %520 = vmatprep.subr.mxu0 0.0
    %521 = vmatpush1.msra.mxu0 0.0
    %522 = vmatprep.subr.mxu0 0.0
    %523 = vmatpush1.msra.mxu0 0.0
    %524 = vmatprep.subr.mxu0 0.0
    %525 = vmatpush1.msra.mxu0 0.0
    %526 = vmatprep.subr.mxu0 0.0
    %527 = vmatpush1.msra.mxu0 0.0
    %528 = vmatprep.subr.mxu0 0.0
    %529 = vmatpush1.msra.mxu0 0.0
    %530 = vmatprep.subr.mxu0 0.0
    %531 = vmatpush1.msra.mxu0 0.0
    %532 = vmatprep.subr.mxu0 0.0
    %533 = vmatpush1.msra.mxu0 0.0
    %534 = vmatprep.mubr.f32.mxu0 0.0
    %535 = vmatmul.mubr.f32.gmra.mrb[0].mxu0 %v457
    %v536 = vpop.f32.mrb[0].mxu0
    %v537 = vadd.f32 %v462, %v536
    %v538 = vpop.f32.mrb[0].mxu0
    %v539 = vadd.f32 %v463, %v538
    %540 = vdwg.mxu0
    %541 = vmatprep.subr.mxu0 %v36
    %542 = vmatpush1.msra.mxu0 %v35
    %543 = vmatprep.subr.mxu0 %v40
    %544 = vmatpush1.msra.mxu0 %v39
    %545 = vmatprep.subr.mxu0 %v44
    %546 = vmatpush1.msra.mxu0 %v43
    %547 = vmatprep.subr.mxu0 %v48
    %548 = vmatpush1.msra.mxu0 %v47
    %549 = vmatprep.subr.mxu0 %v52
    %550 = vmatpush1.msra.mxu0 %v51
    %551 = vmatprep.subr.mxu0 %v56
    %552 = vmatpush1.msra.mxu0 %v55
    %553 = vmatprep.subr.mxu0 %v60
    %554 = vmatpush1.msra.mxu0 %v59
    %555 = vmatprep.subr.mxu0 %v64
    %556 = vmatpush1.msra.mxu0 %v63
    %557 = vmatprep.subr.mxu0 %v68
    %558 = vmatpush1.msra.mxu0 %v67
    %559 = vmatprep.subr.mxu0 %v72
    %560 = vmatpush1.msra.mxu0 %v71
    %561 = vmatprep.subr.mxu0 %v76
    %562 = vmatpush1.msra.mxu0 %v75
    %563 = vmatprep.subr.mxu0 %v80
    %564 = vmatpush1.msra.mxu0 %v79
    %565 = vmatprep.subr.mxu0 %v84
    %566 = vmatpush1.msra.mxu0 %v83
    %567 = vmatprep.subr.mxu0 %v88
    %568 = vmatpush1.msra.mxu0 %v87
    %569 = vmatprep.subr.mxu0 %v92
    %570 = vmatpush1.msra.mxu0 %v91
    %571 = vmatprep.subr.mxu0 %v96
    %572 = vmatpush1.msra.mxu0 %v95
    %573 = vmatprep.subr.mxu0 0.0
    %574 = vmatpush1.msra.mxu0 0.0
    %575 = vmatprep.subr.mxu0 0.0
    %576 = vmatpush1.msra.mxu0 0.0
    %577 = vmatprep.subr.mxu0 0.0
    %578 = vmatpush1.msra.mxu0 0.0
    %579 = vmatprep.subr.mxu0 0.0
    %580 = vmatpush1.msra.mxu0 0.0
    %581 = vmatprep.subr.mxu0 0.0
    %582 = vmatpush1.msra.mxu0 0.0
    %583 = vmatprep.subr.mxu0 0.0
    %584 = vmatpush1.msra.mxu0 0.0
    %585 = vmatprep.subr.mxu0 0.0
    %586 = vmatpush1.msra.mxu0 0.0
    %587 = vmatprep.subr.mxu0 0.0
    %588 = vmatpush1.msra.mxu0 0.0
    %589 = vmatprep.subr.mxu0 0.0
    %590 = vmatpush1.msra.mxu0 0.0
    %591 = vmatprep.subr.mxu0 0.0
    %592 = vmatpush1.msra.mxu0 0.0
    %593 = vmatprep.subr.mxu0 0.0
    %594 = vmatpush1.msra.mxu0 0.0
    %595 = vmatprep.subr.mxu0 0.0
    %596 = vmatpush1.msra.mxu0 0.0
    %597 = vmatprep.subr.mxu0 0.0
    %598 = vmatpush1.msra.mxu0 0.0
    %599 = vmatprep.subr.mxu0 0.0
    %600 = vmatpush1.msra.mxu0 0.0
    %601 = vmatprep.subr.mxu0 0.0
    %602 = vmatpush1.msra.mxu0 0.0
    %603 = vmatprep.subr.mxu0 0.0
    %604 = vmatpush1.msra.mxu0 0.0
    %605 = vmatprep.mubr.f32.mxu0 0.0
    %606 = vmatmul.mubr.f32.gmra.mrb[0].mxu0 %v457
    %v607 = vpop.f32.mrb[0].mxu0
    %v608 = vadd.f32 %v464, %v607
    %v609 = vpop.f32.mrb[0].mxu0
    %v610 = vadd.f32 %v465, %v609
    %611 = vdwg.mxu0
    %v612 = vxor.u32 %v537, 2147483648
    %v613 = vxor.u32 %v539, 2147483648
    %v614 = vxor.u32 %v608, 2147483648
    %v615 = vmul.f32 %v612, 1.442695
    %v616 = vpow.pop %v615
    %v617 = vmul.f32 %v613, 1.442695
    %v618 = vpow.pop %v617
    %v619 = vmul.f32 %v614, 1.442695
    %v620 = vpow.pop %v619
    %v621 = vadd.f32 %v616, 1.0
    %v622 = vadd.f32 %v618, 1.0
    %v623 = vadd.f32 %v620, 1.0
    %v624 = vrcp.pop %v621
    %v625 = vmul.f32 1.0, %v624
    %v626 = vrcp.pop %v622
    %v627 = vmul.f32 1.0, %v626
    %v628 = vrcp.pop %v623
    %v629 = vmul.f32 1.0, %v628
    %v630 = vtanh.pop %v610
    %v631 = vmul.f32 %v627, %v455
    %v632 = vmul.f32 %v625, %v630
    %v633 = vadd.f32 %v631, %v632
    %v634 = vtanh.pop %v633
    %v635 = vmul.f32 %v629, %v634
    %v636 = vrot.slane %v217, 2
    %v637 = vrot.slane %v219, 2
    %v638 = vrot.slane %v288, 2
    %v639 = vrot.slane %v290, 2
    %644 = vmatprep.subr.mxu0 %v34
    %645 = vmatpush1.msra.mxu0 %v33
    %646 = vmatprep.subr.mxu0 %v38
    %647 = vmatpush1.msra.mxu0 %v37
    %648 = vmatprep.subr.mxu0 %v42
    %649 = vmatpush1.msra.mxu0 %v41
    %650 = vmatprep.subr.mxu0 %v46
    %651 = vmatpush1.msra.mxu0 %v45
    %652 = vmatprep.subr.mxu0 %v50
    %653 = vmatpush1.msra.mxu0 %v49
    %654 = vmatprep.subr.mxu0 %v54
    %655 = vmatpush1.msra.mxu0 %v53
    %656 = vmatprep.subr.mxu0 %v58
    %657 = vmatpush1.msra.mxu0 %v57
    %658 = vmatprep.subr.mxu0 %v62
    %659 = vmatpush1.msra.mxu0 %v61
    %660 = vmatprep.subr.mxu0 %v66
    %661 = vmatpush1.msra.mxu0 %v65
    %662 = vmatprep.subr.mxu0 %v70
    %663 = vmatpush1.msra.mxu0 %v69
    %664 = vmatprep.subr.mxu0 %v74
    %665 = vmatpush1.msra.mxu0 %v73
    %666 = vmatprep.subr.mxu0 %v78
    %667 = vmatpush1.msra.mxu0 %v77
    %668 = vmatprep.subr.mxu0 %v82
    %669 = vmatpush1.msra.mxu0 %v81
    %670 = vmatprep.subr.mxu0 %v86
    %671 = vmatpush1.msra.mxu0 %v85
    %672 = vmatprep.subr.mxu0 %v90
    %673 = vmatpush1.msra.mxu0 %v89
    %674 = vmatprep.subr.mxu0 %v94
    %675 = vmatpush1.msra.mxu0 %v93
    %676 = vmatprep.subr.mxu0 0.0
    %677 = vmatpush1.msra.mxu0 0.0
    %678 = vmatprep.subr.mxu0 0.0
    %679 = vmatpush1.msra.mxu0 0.0
    %680 = vmatprep.subr.mxu0 0.0
    %681 = vmatpush1.msra.mxu0 0.0
    %682 = vmatprep.subr.mxu0 0.0
    %683 = vmatpush1.msra.mxu0 0.0
    %684 = vmatprep.subr.mxu0 0.0
    %685 = vmatpush1.msra.mxu0 0.0
    %686 = vmatprep.subr.mxu0 0.0
    %687 = vmatpush1.msra.mxu0 0.0
    %688 = vmatprep.subr.mxu0 0.0
    %689 = vmatpush1.msra.mxu0 0.0
    %690 = vmatprep.subr.mxu0 0.0
    %691 = vmatpush1.msra.mxu0 0.0
    %692 = vmatprep.subr.mxu0 0.0
    %693 = vmatpush1.msra.mxu0 0.0
    %694 = vmatprep.subr.mxu0 0.0
    %695 = vmatpush1.msra.mxu0 0.0
    %696 = vmatprep.subr.mxu0 0.0
    %697 = vmatpush1.msra.mxu0 0.0
    %698 = vmatprep.subr.mxu0 0.0
    %699 = vmatpush1.msra.mxu0 0.0
    %700 = vmatprep.subr.mxu0 0.0
    %701 = vmatpush1.msra.mxu0 0.0
    %702 = vmatprep.subr.mxu0 0.0
    %703 = vmatpush1.msra.mxu0 0.0
    %704 = vmatprep.subr.mxu0 0.0
    %705 = vmatpush1.msra.mxu0 0.0
    %706 = vmatprep.subr.mxu0 0.0
    %707 = vmatpush1.msra.mxu0 0.0
    %708 = vmatprep.mubr.f32.mxu0 0.0
    %709 = vmatmul.mubr.f32.gmra.mrb[0].mxu0 %v635
    %v710 = vpop.f32.mrb[0].mxu0
    %v711 = vadd.f32 %v636, %v710
    %v712 = vpop.f32.mrb[0].mxu0
    %v713 = vadd.f32 %v637, %v712
    %714 = vdwg.mxu0
    %715 = vmatprep.subr.mxu0 %v36
    %716 = vmatpush1.msra.mxu0 %v35
    %717 = vmatprep.subr.mxu0 %v40
    %718 = vmatpush1.msra.mxu0 %v39
    %719 = vmatprep.subr.mxu0 %v44
    %720 = vmatpush1.msra.mxu0 %v43
    %721 = vmatprep.subr.mxu0 %v48
    %722 = vmatpush1.msra.mxu0 %v47
    %723 = vmatprep.subr.mxu0 %v52
    %724 = vmatpush1.msra.mxu0 %v51
    %725 = vmatprep.subr.mxu0 %v56
    %726 = vmatpush1.msra.mxu0 %v55
    %727 = vmatprep.subr.mxu0 %v60
    %728 = vmatpush1.msra.mxu0 %v59
    %729 = vmatprep.subr.mxu0 %v64
    %730 = vmatpush1.msra.mxu0 %v63
    %731 = vmatprep.subr.mxu0 %v68
    %732 = vmatpush1.msra.mxu0 %v67
    %733 = vmatprep.subr.mxu0 %v72
    %734 = vmatpush1.msra.mxu0 %v71
    %735 = vmatprep.subr.mxu0 %v76
    %736 = vmatpush1.msra.mxu0 %v75
    %737 = vmatprep.subr.mxu0 %v80
    %738 = vmatpush1.msra.mxu0 %v79
    %739 = vmatprep.subr.mxu0 %v84
    %740 = vmatpush1.msra.mxu0 %v83
    %741 = vmatprep.subr.mxu0 %v88
    %742 = vmatpush1.msra.mxu0 %v87
    %743 = vmatprep.subr.mxu0 %v92
    %744 = vmatpush1.msra.mxu0 %v91
    %745 = vmatprep.subr.mxu0 %v96
    %746 = vmatpush1.msra.mxu0 %v95
    %747 = vmatprep.subr.mxu0 0.0
    %748 = vmatpush1.msra.mxu0 0.0
    %749 = vmatprep.subr.mxu0 0.0
    %750 = vmatpush1.msra.mxu0 0.0
    %751 = vmatprep.subr.mxu0 0.0
    %752 = vmatpush1.msra.mxu0 0.0
    %753 = vmatprep.subr.mxu0 0.0
    %754 = vmatpush1.msra.mxu0 0.0
    %755 = vmatprep.subr.mxu0 0.0
    %756 = vmatpush1.msra.mxu0 0.0
    %757 = vmatprep.subr.mxu0 0.0
    %758 = vmatpush1.msra.mxu0 0.0
    %759 = vmatprep.subr.mxu0 0.0
    %760 = vmatpush1.msra.mxu0 0.0
    %761 = vmatprep.subr.mxu0 0.0
    %762 = vmatpush1.msra.mxu0 0.0
    %763 = vmatprep.subr.mxu0 0.0
    %764 = vmatpush1.msra.mxu0 0.0
    %765 = vmatprep.subr.mxu0 0.0
    %766 = vmatpush1.msra.mxu0 0.0
    %767 = vmatprep.subr.mxu0 0.0
    %768 = vmatpush1.msra.mxu0 0.0
    %769 = vmatprep.subr.mxu0 0.0
    %770 = vmatpush1.msra.mxu0 0.0
    %771 = vmatprep.subr.mxu0 0.0
    %772 = vmatpush1.msra.mxu0 0.0
    %773 = vmatprep.subr.mxu0 0.0
    %774 = vmatpush1.msra.mxu0 0.0
    %775 = vmatprep.subr.mxu0 0.0
    %776 = vmatpush1.msra.mxu0 0.0
    %777 = vmatprep.subr.mxu0 0.0
    %778 = vmatpush1.msra.mxu0 0.0
    %779 = vmatprep.mubr.f32.mxu0 0.0
    %780 = vmatmul.mubr.f32.gmra.mrb[0].mxu0 %v635
    %v781 = vpop.f32.mrb[0].mxu0
    %v782 = vadd.f32 %v638, %v781
    %v783 = vpop.f32.mrb[0].mxu0
    %v784 = vadd.f32 %v639, %v783
    %785 = vdwg.mxu0
    %v786 = vxor.u32 %v711, 2147483648
    %v787 = vxor.u32 %v713, 2147483648
    %v788 = vxor.u32 %v782, 2147483648
    %v789 = vmul.f32 %v786, 1.442695
    %v790 = vpow.pop %v789
    %v791 = vmul.f32 %v787, 1.442695
    %v792 = vpow.pop %v791
    %v793 = vmul.f32 %v788, 1.442695
    %v794 = vpow.pop %v793
    %v795 = vadd.f32 %v790, 1.0
    %v796 = vadd.f32 %v792, 1.0
    %v797 = vadd.f32 %v794, 1.0
    %v798 = vrcp.pop %v795
    %v799 = vmul.f32 1.0, %v798
    %v800 = vrcp.pop %v796
    %v801 = vmul.f32 1.0, %v800
    %v802 = vrcp.pop %v797
    %v803 = vmul.f32 1.0, %v802
    %v804 = vtanh.pop %v784
    %v805 = vmul.f32 %v801, %v633
    %v806 = vmul.f32 %v799, %v804
    %v807 = vadd.f32 %v805, %v806
    %v808 = vtanh.pop %v807
    %v809 = vmul.f32 %v803, %v808
    %v810 = vrot.slane %v217, 3
    %v811 = vrot.slane %v219, 3
    %v812 = vrot.slane %v288, 3
    %v813 = vrot.slane %v290, 3
    %818 = vmatprep.subr.mxu0 %v34
    %819 = vmatpush1.msra.mxu0 %v33
    %820 = vmatprep.subr.mxu0 %v38
    %821 = vmatpush1.msra.mxu0 %v37
    %822 = vmatprep.subr.mxu0 %v42
    %823 = vmatpush1.msra.mxu0 %v41
    %824 = vmatprep.subr.mxu0 %v46
    %825 = vmatpush1.msra.mxu0 %v45
    %826 = vmatprep.subr.mxu0 %v50
    %827 = vmatpush1.msra.mxu0 %v49
    %828 = vmatprep.subr.mxu0 %v54
    %829 = vmatpush1.msra.mxu0 %v53
    %830 = vmatprep.subr.mxu0 %v58
    %831 = vmatpush1.msra.mxu0 %v57
    %832 = vmatprep.subr.mxu0 %v62
    %833 = vmatpush1.msra.mxu0 %v61
    %834 = vmatprep.subr.mxu0 %v66
    %835 = vmatpush1.msra.mxu0 %v65
    %836 = vmatprep.subr.mxu0 %v70
    %837 = vmatpush1.msra.mxu0 %v69
    %838 = vmatprep.subr.mxu0 %v74
    %839 = vmatpush1.msra.mxu0 %v73
    %840 = vmatprep.subr.mxu0 %v78
    %841 = vmatpush1.msra.mxu0 %v77
    %842 = vmatprep.subr.mxu0 %v82
    %843 = vmatpush1.msra.mxu0 %v81
    %844 = vmatprep.subr.mxu0 %v86
    %845 = vmatpush1.msra.mxu0 %v85
    %846 = vmatprep.subr.mxu0 %v90
    %847 = vmatpush1.msra.mxu0 %v89
    %848 = vmatprep.subr.mxu0 %v94
    %849 = vmatpush1.msra.mxu0 %v93
    %850 = vmatprep.subr.mxu0 0.0
    %851 = vmatpush1.msra.mxu0 0.0
    %852 = vmatprep.subr.mxu0 0.0
    %853 = vmatpush1.msra.mxu0 0.0
    %854 = vmatprep.subr.mxu0 0.0
    %855 = vmatpush1.msra.mxu0 0.0
    %856 = vmatprep.subr.mxu0 0.0
    %857 = vmatpush1.msra.mxu0 0.0
    %858 = vmatprep.subr.mxu0 0.0
    %859 = vmatpush1.msra.mxu0 0.0
    %860 = vmatprep.subr.mxu0 0.0
    %861 = vmatpush1.msra.mxu0 0.0
    %862 = vmatprep.subr.mxu0 0.0
    %863 = vmatpush1.msra.mxu0 0.0
    %864 = vmatprep.subr.mxu0 0.0
    %865 = vmatpush1.msra.mxu0 0.0
    %866 = vmatprep.subr.mxu0 0.0
    %867 = vmatpush1.msra.mxu0 0.0
    %868 = vmatprep.subr.mxu0 0.0
    %869 = vmatpush1.msra.mxu0 0.0
    %870 = vmatprep.subr.mxu0 0.0
    %871 = vmatpush1.msra.mxu0 0.0
    %872 = vmatprep.subr.mxu0 0.0
    %873 = vmatpush1.msra.mxu0 0.0
    %874 = vmatprep.subr.mxu0 0.0
    %875 = vmatpush1.msra.mxu0 0.0
    %876 = vmatprep.subr.mxu0 0.0
    %877 = vmatpush1.msra.mxu0 0.0
    %878 = vmatprep.subr.mxu0 0.0
    %879 = vmatpush1.msra.mxu0 0.0
    %880 = vmatprep.subr.mxu0 0.0
    %881 = vmatpush1.msra.mxu0 0.0
    %882 = vmatprep.mubr.f32.mxu0 0.0
    %883 = vmatmul.mubr.f32.gmra.mrb[0].mxu0 %v809
    %v884 = vpop.f32.mrb[0].mxu0
    %v885 = vadd.f32 %v810, %v884
    %v886 = vpop.f32.mrb[0].mxu0
    %v887 = vadd.f32 %v811, %v886
    %888 = vdwg.mxu0
    %889 = vmatprep.subr.mxu0 %v36
    %890 = vmatpush1.msra.mxu0 %v35
    %891 = vmatprep.subr.mxu0 %v40
    %892 = vmatpush1.msra.mxu0 %v39
    %893 = vmatprep.subr.mxu0 %v44
    %894 = vmatpush1.msra.mxu0 %v43
    %895 = vmatprep.subr.mxu0 %v48
    %896 = vmatpush1.msra.mxu0 %v47
    %897 = vmatprep.subr.mxu0 %v52
    %898 = vmatpush1.msra.mxu0 %v51
    %899 = vmatprep.subr.mxu0 %v56
    %900 = vmatpush1.msra.mxu0 %v55
    %901 = vmatprep.subr.mxu0 %v60
    %902 = vmatpush1.msra.mxu0 %v59
    %903 = vmatprep.subr.mxu0 %v64
    %904 = vmatpush1.msra.mxu0 %v63
    %905 = vmatprep.subr.mxu0 %v68
    %906 = vmatpush1.msra.mxu0 %v67
    %907 = vmatprep.subr.mxu0 %v72
    %908 = vmatpush1.msra.mxu0 %v71
    %909 = vmatprep.subr.mxu0 %v76
    %910 = vmatpush1.msra.mxu0 %v75
    %911 = vmatprep.subr.mxu0 %v80
    %912 = vmatpush1.msra.mxu0 %v79
    %913 = vmatprep.subr.mxu0 %v84
    %914 = vmatpush1.msra.mxu0 %v83
    %915 = vmatprep.subr.mxu0 %v88
    %916 = vmatpush1.msra.mxu0 %v87
    %917 = vmatprep.subr.mxu0 %v92
    %918 = vmatpush1.msra.mxu0 %v91
    %919 = vmatprep.subr.mxu0 %v96
    %920 = vmatpush1.msra.mxu0 %v95
    %921 = vmatprep.subr.mxu0 0.0
    %922 = vmatpush1.msra.mxu0 0.0
    %923 = vmatprep.subr.mxu0 0.0
    %924 = vmatpush1.msra.mxu0 0.0
    %925 = vmatprep.subr.mxu0 0.0
    %926 = vmatpush1.msra.mxu0 0.0
    %927 = vmatprep.subr.mxu0 0.0
    %928 = vmatpush1.msra.mxu0 0.0
    %929 = vmatprep.subr.mxu0 0.0
    %930 = vmatpush1.msra.mxu0 0.0
    %931 = vmatprep.subr.mxu0 0.0
    %932 = vmatpush1.msra.mxu0 0.0
    %933 = vmatprep.subr.mxu0 0.0
    %934 = vmatpush1.msra.mxu0 0.0
    %935 = vmatprep.subr.mxu0 0.0
    %936 = vmatpush1.msra.mxu0 0.0
    %937 = vmatprep.subr.mxu0 0.0
    %938 = vmatpush1.msra.mxu0 0.0
    %939 = vmatprep.subr.mxu0 0.0
    %940 = vmatpush1.msra.mxu0 0.0
    %941 = vmatprep.subr.mxu0 0.0
    %942 = vmatpush1.msra.mxu0 0.0
    %943 = vmatprep.subr.mxu0 0.0
    %944 = vmatpush1.msra.mxu0 0.0
    %945 = vmatprep.subr.mxu0 0.0
    %946 = vmatpush1.msra.mxu0 0.0
    %947 = vmatprep.subr.mxu0 0.0
    %948 = vmatpush1.msra.mxu0 0.0
    %949 = vmatprep.subr.mxu0 0.0
    %950 = vmatpush1.msra.mxu0 0.0
    %951 = vmatprep.subr.mxu0 0.0
    %952 = vmatpush1.msra.mxu0 0.0
    %953 = vmatprep.mubr.f32.mxu0 0.0
    %954 = vmatmul.mubr.f32.gmra.mrb[0].mxu0 %v809
    %v955 = vpop.f32.mrb[0].mxu0
    %v956 = vadd.f32 %v812, %v955
    %v957 = vpop.f32.mrb[0].mxu0
    %v958 = vadd.f32 %v813, %v957
    %959 = vdwg.mxu0
    %v960 = vxor.u32 %v885, 2147483648
    %v961 = vxor.u32 %v887, 2147483648
    %v962 = vxor.u32 %v956, 2147483648
    %v963 = vmul.f32 %v960, 1.442695
    %v964 = vpow.pop %v963
    %v965 = vmul.f32 %v961, 1.442695
    %v966 = vpow.pop %v965
    %v967 = vmul.f32 %v962, 1.442695
    %v968 = vpow.pop %v967
    %v969 = vadd.f32 %v964, 1.0
    %v970 = vadd.f32 %v966, 1.0
    %v971 = vadd.f32 %v968, 1.0
    %v972 = vrcp.pop %v969
    %v973 = vmul.f32 1.0, %v972
    %v974 = vrcp.pop %v970
    %v975 = vmul.f32 1.0, %v974
    %v976 = vrcp.pop %v971
    %v977 = vmul.f32 1.0, %v976
    %v978 = vtanh.pop %v958
    %v979 = vmul.f32 %v975, %v807
    %v980 = vmul.f32 %v973, %v978
    %v981 = vadd.f32 %v979, %v980
    %v982 = vtanh.pop %v981
    %v983 = vmul.f32 %v977, %v982
    %v984 = vrot.slane %v217, 4
    %v985 = vrot.slane %v219, 4
    %v986 = vrot.slane %v288, 4
    %v987 = vrot.slane %v290, 4
    %992 = vmatprep.subr.mxu0 %v34
    %993 = vmatpush1.msra.mxu0 %v33
    %994 = vmatprep.subr.mxu0 %v38
    %995 = vmatpush1.msra.mxu0 %v37
    %996 = vmatprep.subr.mxu0 %v42
    %997 = vmatpush1.msra.mxu0 %v41
    %998 = vmatprep.subr.mxu0 %v46
    %999 = vmatpush1.msra.mxu0 %v45
    %1000 = vmatprep.subr.mxu0 %v50
    %1001 = vmatpush1.msra.mxu0 %v49
    %1002 = vmatprep.subr.mxu0 %v54
    %1003 = vmatpush1.msra.mxu0 %v53
    %1004 = vmatprep.subr.mxu0 %v58
    %1005 = vmatpush1.msra.mxu0 %v57
    %1006 = vmatprep.subr.mxu0 %v62
    %1007 = vmatpush1.msra.mxu0 %v61
    %1008 = vmatprep.subr.mxu0 %v66
    %1009 = vmatpush1.msra.mxu0 %v65
    %1010 = vmatprep.subr.mxu0 %v70
    %1011 = vmatpush1.msra.mxu0 %v69
    %1012 = vmatprep.subr.mxu0 %v74
    %1013 = vmatpush1.msra.mxu0 %v73
    %1014 = vmatprep.subr.mxu0 %v78
    %1015 = vmatpush1.msra.mxu0 %v77
    %1016 = vmatprep.subr.mxu0 %v82
    %1017 = vmatpush1.msra.mxu0 %v81
    %1018 = vmatprep.subr.mxu0 %v86
    %1019 = vmatpush1.msra.mxu0 %v85
    %1020 = vmatprep.subr.mxu0 %v90
    %1021 = vmatpush1.msra.mxu0 %v89
    %1022 = vmatprep.subr.mxu0 %v94
    %1023 = vmatpush1.msra.mxu0 %v93
    %1024 = vmatprep.subr.mxu0 0.0
    %1025 = vmatpush1.msra.mxu0 0.0
    %1026 = vmatprep.subr.mxu0 0.0
    %1027 = vmatpush1.msra.mxu0 0.0
    %1028 = vmatprep.subr.mxu0 0.0
    %1029 = vmatpush1.msra.mxu0 0.0
    %1030 = vmatprep.subr.mxu0 0.0
    %1031 = vmatpush1.msra.mxu0 0.0
    %1032 = vmatprep.subr.mxu0 0.0
    %1033 = vmatpush1.msra.mxu0 0.0
    %1034 = vmatprep.subr.mxu0 0.0
    %1035 = vmatpush1.msra.mxu0 0.0
    %1036 = vmatprep.subr.mxu0 0.0
    %1037 = vmatpush1.msra.mxu0 0.0
    %1038 = vmatprep.subr.mxu0 0.0
    %1039 = vmatpush1.msra.mxu0 0.0
    %1040 = vmatprep.subr.mxu0 0.0
    %1041 = vmatpush1.msra.mxu0 0.0
    %1042 = vmatprep.subr.mxu0 0.0
    %1043 = vmatpush1.msra.mxu0 0.0
    %1044 = vmatprep.subr.mxu0 0.0
    %1045 = vmatpush1.msra.mxu0 0.0
    %1046 = vmatprep.subr.mxu0 0.0
    %1047 = vmatpush1.msra.mxu0 0.0
    %1048 = vmatprep.subr.mxu0 0.0
    %1049 = vmatpush1.msra.mxu0 0.0
    %1050 = vmatprep.subr.mxu0 0.0
    %1051 = vmatpush1.msra.mxu0 0.0
    %1052 = vmatprep.subr.mxu0 0.0
    %1053 = vmatpush1.msra.mxu0 0.0
    %1054 = vmatprep.subr.mxu0 0.0
    %1055 = vmatpush1.msra.mxu0 0.0
    %1056 = vmatprep.mubr.f32.mxu0 0.0
    %1057 = vmatmul.mubr.f32.gmra.mrb[0].mxu0 %v983
    %v1058 = vpop.f32.mrb[0].mxu0
    %v1059 = vadd.f32 %v984, %v1058
    %v1060 = vpop.f32.mrb[0].mxu0
    %v1061 = vadd.f32 %v985, %v1060
    %1062 = vdwg.mxu0
    %1063 = vmatprep.subr.mxu0 %v36
    %1064 = vmatpush1.msra.mxu0 %v35
    %1065 = vmatprep.subr.mxu0 %v40
    %1066 = vmatpush1.msra.mxu0 %v39
    %1067 = vmatprep.subr.mxu0 %v44
    %1068 = vmatpush1.msra.mxu0 %v43
    %1069 = vmatprep.subr.mxu0 %v48
    %1070 = vmatpush1.msra.mxu0 %v47
    %1071 = vmatprep.subr.mxu0 %v52
    %1072 = vmatpush1.msra.mxu0 %v51
    %1073 = vmatprep.subr.mxu0 %v56
    %1074 = vmatpush1.msra.mxu0 %v55
    %1075 = vmatprep.subr.mxu0 %v60
    %1076 = vmatpush1.msra.mxu0 %v59
    %1077 = vmatprep.subr.mxu0 %v64
    %1078 = vmatpush1.msra.mxu0 %v63
    %1079 = vmatprep.subr.mxu0 %v68
    %1080 = vmatpush1.msra.mxu0 %v67
    %1081 = vmatprep.subr.mxu0 %v72
    %1082 = vmatpush1.msra.mxu0 %v71
    %1083 = vmatprep.subr.mxu0 %v76
    %1084 = vmatpush1.msra.mxu0 %v75
    %1085 = vmatprep.subr.mxu0 %v80
    %1086 = vmatpush1.msra.mxu0 %v79
    %1087 = vmatprep.subr.mxu0 %v84
    %1088 = vmatpush1.msra.mxu0 %v83
    %1089 = vmatprep.subr.mxu0 %v88
    %1090 = vmatpush1.msra.mxu0 %v87
    %1091 = vmatprep.subr.mxu0 %v92
    %1092 = vmatpush1.msra.mxu0 %v91
    %1093 = vmatprep.subr.mxu0 %v96
    %1094 = vmatpush1.msra.mxu0 %v95
    %1095 = vmatprep.subr.mxu0 0.0
    %1096 = vmatpush1.msra.mxu0 0.0
    %1097 = vmatprep.subr.mxu0 0.0
    %1098 = vmatpush1.msra.mxu0 0.0
    %1099 = vmatprep.subr.mxu0 0.0
    %1100 = vmatpush1.msra.mxu0 0.0
    %1101 = vmatprep.subr.mxu0 0.0
    %1102 = vmatpush1.msra.mxu0 0.0
    %1103 = vmatprep.subr.mxu0 0.0
    %1104 = vmatpush1.msra.mxu0 0.0
    %1105 = vmatprep.subr.mxu0 0.0
    %1106 = vmatpush1.msra.mxu0 0.0
    %1107 = vmatprep.subr.mxu0 0.0
    %1108 = vmatpush1.msra.mxu0 0.0
    %1109 = vmatprep.subr.mxu0 0.0
    %1110 = vmatpush1.msra.mxu0 0.0
    %1111 = vmatprep.subr.mxu0 0.0
    %1112 = vmatpush1.msra.mxu0 0.0
    %1113 = vmatprep.subr.mxu0 0.0
    %1114 = vmatpush1.msra.mxu0 0.0
    %1115 = vmatprep.subr.mxu0 0.0
    %1116 = vmatpush1.msra.mxu0 0.0
    %1117 = vmatprep.subr.mxu0 0.0
    %1118 = vmatpush1.msra.mxu0 0.0
    %1119 = vmatprep.subr.mxu0 0.0
    %1120 = vmatpush1.msra.mxu0 0.0
    %1121 = vmatprep.subr.mxu0 0.0
    %1122 = vmatpush1.msra.mxu0 0.0
    %1123 = vmatprep.subr.mxu0 0.0
    %1124 = vmatpush1.msra.mxu0 0.0
    %1125 = vmatprep.subr.mxu0 0.0
    %1126 = vmatpush1.msra.mxu0 0.0
    %1127 = vmatprep.mubr.f32.mxu0 0.0
    %1128 = vmatmul.mubr.f32.gmra.mrb[0].mxu0 %v983
    %v1129 = vpop.f32.mrb[0].mxu0
    %v1130 = vadd.f32 %v986, %v1129
    %v1131 = vpop.f32.mrb[0].mxu0
    %v1132 = vadd.f32 %v987, %v1131
    %1133 = vdwg.mxu0
    %v1134 = vxor.u32 %v1059, 2147483648
    %v1135 = vxor.u32 %v1061, 2147483648
    %v1136 = vxor.u32 %v1130, 2147483648
    %v1137 = vmul.f32 %v1134, 1.442695
    %v1138 = vpow.pop %v1137
    %v1139 = vmul.f32 %v1135, 1.442695
    %v1140 = vpow.pop %v1139
    %v1141 = vmul.f32 %v1136, 1.442695
    %v1142 = vpow.pop %v1141
    %v1143 = vadd.f32 %v1138, 1.0
    %v1144 = vadd.f32 %v1140, 1.0
    %v1145 = vadd.f32 %v1142, 1.0
    %v1146 = vrcp.pop %v1143
    %v1147 = vmul.f32 1.0, %v1146
    %v1148 = vrcp.pop %v1144
    %v1149 = vmul.f32 1.0, %v1148
    %v1150 = vrcp.pop %v1145
    %v1151 = vmul.f32 1.0, %v1150
    %v1152 = vtanh.pop %v1132
    %v1153 = vmul.f32 %v1149, %v981
    %v1154 = vmul.f32 %v1147, %v1152
    %v1155 = vadd.f32 %v1153, %v1154
    %v1156 = vtanh.pop %v1155
    %v1157 = vmul.f32 %v1151, %v1156
    %v1158 = vrot.slane %v217, 5
    %v1159 = vrot.slane %v219, 5
    %v1160 = vrot.slane %v288, 5
    %v1161 = vrot.slane %v290, 5
    %1166 = vmatprep.subr.mxu0 %v34
    %1167 = vmatpush1.msra.mxu0 %v33
    %1168 = vmatprep.subr.mxu0 %v38
    %1169 = vmatpush1.msra.mxu0 %v37
    %1170 = vmatprep.subr.mxu0 %v42
    %1171 = vmatpush1.msra.mxu0 %v41
    %1172 = vmatprep.subr.mxu0 %v46
    %1173 = vmatpush1.msra.mxu0 %v45
    %1174 = vmatprep.subr.mxu0 %v50
    %1175 = vmatpush1.msra.mxu0 %v49
    %1176 = vmatprep.subr.mxu0 %v54
    %1177 = vmatpush1.msra.mxu0 %v53
    %1178 = vmatprep.subr.mxu0 %v58
    %1179 = vmatpush1.msra.mxu0 %v57
    %1180 = vmatprep.subr.mxu0 %v62
    %1181 = vmatpush1.msra.mxu0 %v61
    %1182 = vmatprep.subr.mxu0 %v66
    %1183 = vmatpush1.msra.mxu0 %v65
    %1184 = vmatprep.subr.mxu0 %v70
    %1185 = vmatpush1.msra.mxu0 %v69
    %1186 = vmatprep.subr.mxu0 %v74
    %1187 = vmatpush1.msra.mxu0 %v73
    %1188 = vmatprep.subr.mxu0 %v78
    %1189 = vmatpush1.msra.mxu0 %v77
    %1190 = vmatprep.subr.mxu0 %v82
    %1191 = vmatpush1.msra.mxu0 %v81
    %1192 = vmatprep.subr.mxu0 %v86
    %1193 = vmatpush1.msra.mxu0 %v85
    %1194 = vmatprep.subr.mxu0 %v90
    %1195 = vmatpush1.msra.mxu0 %v89
    %1196 = vmatprep.subr.mxu0 %v94
    %1197 = vmatpush1.msra.mxu0 %v93
    %1198 = vmatprep.subr.mxu0 0.0
    %1199 = vmatpush1.msra.mxu0 0.0
    %1200 = vmatprep.subr.mxu0 0.0
    %1201 = vmatpush1.msra.mxu0 0.0
    %1202 = vmatprep.subr.mxu0 0.0
    %1203 = vmatpush1.msra.mxu0 0.0
    %1204 = vmatprep.subr.mxu0 0.0
    %1205 = vmatpush1.msra.mxu0 0.0
    %1206 = vmatprep.subr.mxu0 0.0
    %1207 = vmatpush1.msra.mxu0 0.0
    %1208 = vmatprep.subr.mxu0 0.0
    %1209 = vmatpush1.msra.mxu0 0.0
    %1210 = vmatprep.subr.mxu0 0.0
    %1211 = vmatpush1.msra.mxu0 0.0
    %1212 = vmatprep.subr.mxu0 0.0
    %1213 = vmatpush1.msra.mxu0 0.0
    %1214 = vmatprep.subr.mxu0 0.0
    %1215 = vmatpush1.msra.mxu0 0.0
    %1216 = vmatprep.subr.mxu0 0.0
    %1217 = vmatpush1.msra.mxu0 0.0
    %1218 = vmatprep.subr.mxu0 0.0
    %1219 = vmatpush1.msra.mxu0 0.0
    %1220 = vmatprep.subr.mxu0 0.0
    %1221 = vmatpush1.msra.mxu0 0.0
    %1222 = vmatprep.subr.mxu0 0.0
    %1223 = vmatpush1.msra.mxu0 0.0
    %1224 = vmatprep.subr.mxu0 0.0
    %1225 = vmatpush1.msra.mxu0 0.0
    %1226 = vmatprep.subr.mxu0 0.0
    %1227 = vmatpush1.msra.mxu0 0.0
    %1228 = vmatprep.subr.mxu0 0.0
    %1229 = vmatpush1.msra.mxu0 0.0
    %1230 = vmatprep.mubr.f32.mxu0 0.0
    %1231 = vmatmul.mubr.f32.gmra.mrb[0].mxu0 %v1157
    %v1232 = vpop.f32.mrb[0].mxu0
    %v1233 = vadd.f32 %v1158, %v1232
    %v1234 = vpop.f32.mrb[0].mxu0
    %v1235 = vadd.f32 %v1159, %v1234
    %1236 = vdwg.mxu0
    %1237 = vmatprep.subr.mxu0 %v36
    %1238 = vmatpush1.msra.mxu0 %v35
    %1239 = vmatprep.subr.mxu0 %v40
    %1240 = vmatpush1.msra.mxu0 %v39
    %1241 = vmatprep.subr.mxu0 %v44
    %1242 = vmatpush1.msra.mxu0 %v43
    %1243 = vmatprep.subr.mxu0 %v48
    %1244 = vmatpush1.msra.mxu0 %v47
    %1245 = vmatprep.subr.mxu0 %v52
    %1246 = vmatpush1.msra.mxu0 %v51
    %1247 = vmatprep.subr.mxu0 %v56
    %1248 = vmatpush1.msra.mxu0 %v55
    %1249 = vmatprep.subr.mxu0 %v60
    %1250 = vmatpush1.msra.mxu0 %v59
    %1251 = vmatprep.subr.mxu0 %v64
    %1252 = vmatpush1.msra.mxu0 %v63
    %1253 = vmatprep.subr.mxu0 %v68
    %1254 = vmatpush1.msra.mxu0 %v67
    %1255 = vmatprep.subr.mxu0 %v72
    %1256 = vmatpush1.msra.mxu0 %v71
    %1257 = vmatprep.subr.mxu0 %v76
    %1258 = vmatpush1.msra.mxu0 %v75
    %1259 = vmatprep.subr.mxu0 %v80
    %1260 = vmatpush1.msra.mxu0 %v79
    %1261 = vmatprep.subr.mxu0 %v84
    %1262 = vmatpush1.msra.mxu0 %v83
    %1263 = vmatprep.subr.mxu0 %v88
    %1264 = vmatpush1.msra.mxu0 %v87
    %1265 = vmatprep.subr.mxu0 %v92
    %1266 = vmatpush1.msra.mxu0 %v91
    %1267 = vmatprep.subr.mxu0 %v96
    %1268 = vmatpush1.msra.mxu0 %v95
    %1269 = vmatprep.subr.mxu0 0.0
    %1270 = vmatpush1.msra.mxu0 0.0
    %1271 = vmatprep.subr.mxu0 0.0
    %1272 = vmatpush1.msra.mxu0 0.0
    %1273 = vmatprep.subr.mxu0 0.0
    %1274 = vmatpush1.msra.mxu0 0.0
    %1275 = vmatprep.subr.mxu0 0.0
    %1276 = vmatpush1.msra.mxu0 0.0
    %1277 = vmatprep.subr.mxu0 0.0
    %1278 = vmatpush1.msra.mxu0 0.0
    %1279 = vmatprep.subr.mxu0 0.0
    %1280 = vmatpush1.msra.mxu0 0.0
    %1281 = vmatprep.subr.mxu0 0.0
    %1282 = vmatpush1.msra.mxu0 0.0
    %1283 = vmatprep.subr.mxu0 0.0
    %1284 = vmatpush1.msra.mxu0 0.0
    %1285 = vmatprep.subr.mxu0 0.0
    %1286 = vmatpush1.msra.mxu0 0.0
    %1287 = vmatprep.subr.mxu0 0.0
    %1288 = vmatpush1.msra.mxu0 0.0
    %1289 = vmatprep.subr.mxu0 0.0
    %1290 = vmatpush1.msra.mxu0 0.0
    %1291 = vmatprep.subr.mxu0 0.0
    %1292 = vmatpush1.msra.mxu0 0.0
    %1293 = vmatprep.subr.mxu0 0.0
    %1294 = vmatpush1.msra.mxu0 0.0
    %1295 = vmatprep.subr.mxu0 0.0
    %1296 = vmatpush1.msra.mxu0 0.0
    %1297 = vmatprep.subr.mxu0 0.0
    %1298 = vmatpush1.msra.mxu0 0.0
    %1299 = vmatprep.subr.mxu0 0.0
    %1300 = vmatpush1.msra.mxu0 0.0
    %1301 = vmatprep.mubr.f32.mxu0 0.0
    %1302 = vmatmul.mubr.f32.gmra.mrb[0].mxu0 %v1157
    %v1303 = vpop.f32.mrb[0].mxu0
    %v1304 = vadd.f32 %v1160, %v1303
    %v1305 = vpop.f32.mrb[0].mxu0
    %v1306 = vadd.f32 %v1161, %v1305
    %1307 = vdwg.mxu0
    %v1308 = vxor.u32 %v1233, 2147483648
    %v1309 = vxor.u32 %v1235, 2147483648
    %v1310 = vxor.u32 %v1304, 2147483648
    %v1311 = vmul.f32 %v1308, 1.442695
    %v1312 = vpow.pop %v1311
    %v1313 = vmul.f32 %v1309, 1.442695
    %v1314 = vpow.pop %v1313
    %v1315 = vmul.f32 %v1310, 1.442695
    %v1316 = vpow.pop %v1315
    %v1317 = vadd.f32 %v1312, 1.0
    %v1318 = vadd.f32 %v1314, 1.0
    %v1319 = vadd.f32 %v1316, 1.0
    %v1320 = vrcp.pop %v1317
    %v1321 = vmul.f32 1.0, %v1320
    %v1322 = vrcp.pop %v1318
    %v1323 = vmul.f32 1.0, %v1322
    %v1324 = vrcp.pop %v1319
    %v1325 = vmul.f32 1.0, %v1324
    %v1326 = vtanh.pop %v1306
    %v1327 = vmul.f32 %v1323, %v1155
    %v1328 = vmul.f32 %v1321, %v1326
    %v1329 = vadd.f32 %v1327, %v1328
    %v1330 = vtanh.pop %v1329
    %v1331 = vmul.f32 %v1325, %v1330
    %v1332 = vrot.slane %v217, 6
    %v1333 = vrot.slane %v219, 6
    %v1334 = vrot.slane %v288, 6
    %v1335 = vrot.slane %v290, 6
    %1340 = vmatprep.subr.mxu0 %v34
    %1341 = vmatpush1.msra.mxu0 %v33
    %1342 = vmatprep.subr.mxu0 %v38
    %1343 = vmatpush1.msra.mxu0 %v37
    %1344 = vmatprep.subr.mxu0 %v42
    %1345 = vmatpush1.msra.mxu0 %v41
    %1346 = vmatprep.subr.mxu0 %v46
    %1347 = vmatpush1.msra.mxu0 %v45
    %1348 = vmatprep.subr.mxu0 %v50
    %1349 = vmatpush1.msra.mxu0 %v49
    %1350 = vmatprep.subr.mxu0 %v54
    %1351 = vmatpush1.msra.mxu0 %v53
    %1352 = vmatprep.subr.mxu0 %v58
    %1353 = vmatpush1.msra.mxu0 %v57
    %1354 = vmatprep.subr.mxu0 %v62
    %1355 = vmatpush1.msra.mxu0 %v61
    %1356 = vmatprep.subr.mxu0 %v66
    %1357 = vmatpush1.msra.mxu0 %v65
    %1358 = vmatprep.subr.mxu0 %v70
    %1359 = vmatpush1.msra.mxu0 %v69
    %1360 = vmatprep.subr.mxu0 %v74
    %1361 = vmatpush1.msra.mxu0 %v73
    %1362 = vmatprep.subr.mxu0 %v78
    %1363 = vmatpush1.msra.mxu0 %v77
    %1364 = vmatprep.subr.mxu0 %v82
    %1365 = vmatpush1.msra.mxu0 %v81
    %1366 = vmatprep.subr.mxu0 %v86
    %1367 = vmatpush1.msra.mxu0 %v85
    %1368 = vmatprep.subr.mxu0 %v90
    %1369 = vmatpush1.msra.mxu0 %v89
    %1370 = vmatprep.subr.mxu0 %v94
    %1371 = vmatpush1.msra.mxu0 %v93
    %1372 = vmatprep.subr.mxu0 0.0
    %1373 = vmatpush1.msra.mxu0 0.0
    %1374 = vmatprep.subr.mxu0 0.0
    %1375 = vmatpush1.msra.mxu0 0.0
    %1376 = vmatprep.subr.mxu0 0.0
    %1377 = vmatpush1.msra.mxu0 0.0
    %1378 = vmatprep.subr.mxu0 0.0
    %1379 = vmatpush1.msra.mxu0 0.0
    %1380 = vmatprep.subr.mxu0 0.0
    %1381 = vmatpush1.msra.mxu0 0.0
    %1382 = vmatprep.subr.mxu0 0.0
    %1383 = vmatpush1.msra.mxu0 0.0
    %1384 = vmatprep.subr.mxu0 0.0
    %1385 = vmatpush1.msra.mxu0 0.0
    %1386 = vmatprep.subr.mxu0 0.0
    %1387 = vmatpush1.msra.mxu0 0.0
    %1388 = vmatprep.subr.mxu0 0.0
    %1389 = vmatpush1.msra.mxu0 0.0
    %1390 = vmatprep.subr.mxu0 0.0
    %1391 = vmatpush1.msra.mxu0 0.0
    %1392 = vmatprep.subr.mxu0 0.0
    %1393 = vmatpush1.msra.mxu0 0.0
    %1394 = vmatprep.subr.mxu0 0.0
    %1395 = vmatpush1.msra.mxu0 0.0
    %1396 = vmatprep.subr.mxu0 0.0
    %1397 = vmatpush1.msra.mxu0 0.0
    %1398 = vmatprep.subr.mxu0 0.0
    %1399 = vmatpush1.msra.mxu0 0.0
    %1400 = vmatprep.subr.mxu0 0.0
    %1401 = vmatpush1.msra.mxu0 0.0
    %1402 = vmatprep.subr.mxu0 0.0
    %1403 = vmatpush1.msra.mxu0 0.0
    %1404 = vmatprep.mubr.f32.mxu0 0.0
    %1405 = vmatmul.mubr.f32.gmra.mrb[0].mxu0 %v1331
    %v1406 = vpop.f32.mrb[0].mxu0
    %v1407 = vadd.f32 %v1332, %v1406
    %v1408 = vpop.f32.mrb[0].mxu0
    %v1409 = vadd.f32 %v1333, %v1408
    %1410 = vdwg.mxu0
    %1411 = vmatprep.subr.mxu0 %v36
    %1412 = vmatpush1.msra.mxu0 %v35
    %1413 = vmatprep.subr.mxu0 %v40
    %1414 = vmatpush1.msra.mxu0 %v39
    %1415 = vmatprep.subr.mxu0 %v44
    %1416 = vmatpush1.msra.mxu0 %v43
    %1417 = vmatprep.subr.mxu0 %v48
    %1418 = vmatpush1.msra.mxu0 %v47
    %1419 = vmatprep.subr.mxu0 %v52
    %1420 = vmatpush1.msra.mxu0 %v51
    %1421 = vmatprep.subr.mxu0 %v56
    %1422 = vmatpush1.msra.mxu0 %v55
    %1423 = vmatprep.subr.mxu0 %v60
    %1424 = vmatpush1.msra.mxu0 %v59
    %1425 = vmatprep.subr.mxu0 %v64
    %1426 = vmatpush1.msra.mxu0 %v63
    %1427 = vmatprep.subr.mxu0 %v68
    %1428 = vmatpush1.msra.mxu0 %v67
    %1429 = vmatprep.subr.mxu0 %v72
    %1430 = vmatpush1.msra.mxu0 %v71
    %1431 = vmatprep.subr.mxu0 %v76
    %1432 = vmatpush1.msra.mxu0 %v75
    %1433 = vmatprep.subr.mxu0 %v80
    %1434 = vmatpush1.msra.mxu0 %v79
    %1435 = vmatprep.subr.mxu0 %v84
    %1436 = vmatpush1.msra.mxu0 %v83
    %1437 = vmatprep.subr.mxu0 %v88
    %1438 = vmatpush1.msra.mxu0 %v87
    %1439 = vmatprep.subr.mxu0 %v92
    %1440 = vmatpush1.msra.mxu0 %v91
    %1441 = vmatprep.subr.mxu0 %v96
    %1442 = vmatpush1.msra.mxu0 %v95
    %1443 = vmatprep.subr.mxu0 0.0
    %1444 = vmatpush1.msra.mxu0 0.0
    %1445 = vmatprep.subr.mxu0 0.0
    %1446 = vmatpush1.msra.mxu0 0.0
    %1447 = vmatprep.subr.mxu0 0.0
    %1448 = vmatpush1.msra.mxu0 0.0
    %1449 = vmatprep.subr.mxu0 0.0
    %1450 = vmatpush1.msra.mxu0 0.0
    %1451 = vmatprep.subr.mxu0 0.0
    %1452 = vmatpush1.msra.mxu0 0.0
    %1453 = vmatprep.subr.mxu0 0.0
    %1454 = vmatpush1.msra.mxu0 0.0
    %1455 = vmatprep.subr.mxu0 0.0
    %1456 = vmatpush1.msra.mxu0 0.0
    %1457 = vmatprep.subr.mxu0 0.0
    %1458 = vmatpush1.msra.mxu0 0.0
    %1459 = vmatprep.subr.mxu0 0.0
    %1460 = vmatpush1.msra.mxu0 0.0
    %1461 = vmatprep.subr.mxu0 0.0
    %1462 = vmatpush1.msra.mxu0 0.0
    %1463 = vmatprep.subr.mxu0 0.0
    %1464 = vmatpush1.msra.mxu0 0.0
    %1465 = vmatprep.subr.mxu0 0.0
    %1466 = vmatpush1.msra.mxu0 0.0
    %1467 = vmatprep.subr.mxu0 0.0
    %1468 = vmatpush1.msra.mxu0 0.0
    %1469 = vmatprep.subr.mxu0 0.0
    %1470 = vmatpush1.msra.mxu0 0.0
    %1471 = vmatprep.subr.mxu0 0.0
    %1472 = vmatpush1.msra.mxu0 0.0
    %1473 = vmatprep.subr.mxu0 0.0
    %1474 = vmatpush1.msra.mxu0 0.0
    %1475 = vmatprep.mubr.f32.mxu0 0.0
    %1476 = vmatmul.mubr.f32.gmra.mrb[0].mxu0 %v1331
    %v1477 = vpop.f32.mrb[0].mxu0
    %v1478 = vadd.f32 %v1334, %v1477
    %v1479 = vpop.f32.mrb[0].mxu0
    %v1480 = vadd.f32 %v1335, %v1479
    %1481 = vdwg.mxu0
    %v1482 = vxor.u32 %v1407, 2147483648
    %v1483 = vxor.u32 %v1409, 2147483648
    %v1484 = vxor.u32 %v1478, 2147483648
    %v1485 = vmul.f32 %v1482, 1.442695
    %v1486 = vpow.pop %v1485
    %v1487 = vmul.f32 %v1483, 1.442695
    %v1488 = vpow.pop %v1487
    %v1489 = vmul.f32 %v1484, 1.442695
    %v1490 = vpow.pop %v1489
    %v1491 = vadd.f32 %v1486, 1.0
    %v1492 = vadd.f32 %v1488, 1.0
    %v1493 = vadd.f32 %v1490, 1.0
    %v1494 = vrcp.pop %v1491
    %v1495 = vmul.f32 1.0, %v1494
    %v1496 = vrcp.pop %v1492
    %v1497 = vmul.f32 1.0, %v1496
    %v1498 = vrcp.pop %v1493
    %v1499 = vmul.f32 1.0, %v1498
    %v1500 = vtanh.pop %v1480
    %v1501 = vmul.f32 %v1497, %v1329
    %v1502 = vmul.f32 %v1495, %v1500
    %v1503 = vadd.f32 %v1501, %v1502
    %v1504 = vtanh.pop %v1503
    %v1505 = vmul.f32 %v1499, %v1504
    %v1506 = vrot.slane %v217, 7
    %v1507 = vrot.slane %v219, 7
    %v1508 = vrot.slane %v288, 7
    %v1509 = vrot.slane %v290, 7
    %1514 = vmatprep.subr.mxu0 %v34
    %1515 = vmatpush1.msra.mxu0 %v33
    %1516 = vmatprep.subr.mxu0 %v38
    %1517 = vmatpush1.msra.mxu0 %v37
    %1518 = vmatprep.subr.mxu0 %v42
    %1519 = vmatpush1.msra.mxu0 %v41
    %1520 = vmatprep.subr.mxu0 %v46
    %1521 = vmatpush1.msra.mxu0 %v45
    %1522 = vmatprep.subr.mxu0 %v50
    %1523 = vmatpush1.msra.mxu0 %v49
    %1524 = vmatprep.subr.mxu0 %v54
    %1525 = vmatpush1.msra.mxu0 %v53
    %1526 = vmatprep.subr.mxu0 %v58
    %1527 = vmatpush1.msra.mxu0 %v57
    %1528 = vmatprep.subr.mxu0 %v62
    %1529 = vmatpush1.msra.mxu0 %v61
    %1530 = vmatprep.subr.mxu0 %v66
    %1531 = vmatpush1.msra.mxu0 %v65
    %1532 = vmatprep.subr.mxu0 %v70
    %1533 = vmatpush1.msra.mxu0 %v69
    %1534 = vmatprep.subr.mxu0 %v74
    %1535 = vmatpush1.msra.mxu0 %v73
    %1536 = vmatprep.subr.mxu0 %v78
    %1537 = vmatpush1.msra.mxu0 %v77
    %1538 = vmatprep.subr.mxu0 %v82
    %1539 = vmatpush1.msra.mxu0 %v81
    %1540 = vmatprep.subr.mxu0 %v86
    %1541 = vmatpush1.msra.mxu0 %v85
    %1542 = vmatprep.subr.mxu0 %v90
    %1543 = vmatpush1.msra.mxu0 %v89
    %1544 = vmatprep.subr.mxu0 %v94
    %1545 = vmatpush1.msra.mxu0 %v93
    %1546 = vmatprep.subr.mxu0 0.0
    %1547 = vmatpush1.msra.mxu0 0.0
    %1548 = vmatprep.subr.mxu0 0.0
    %1549 = vmatpush1.msra.mxu0 0.0
    %1550 = vmatprep.subr.mxu0 0.0
    %1551 = vmatpush1.msra.mxu0 0.0
    %1552 = vmatprep.subr.mxu0 0.0
    %1553 = vmatpush1.msra.mxu0 0.0
    %1554 = vmatprep.subr.mxu0 0.0
    %1555 = vmatpush1.msra.mxu0 0.0
    %1556 = vmatprep.subr.mxu0 0.0
    %1557 = vmatpush1.msra.mxu0 0.0
    %1558 = vmatprep.subr.mxu0 0.0
    %1559 = vmatpush1.msra.mxu0 0.0
    %1560 = vmatprep.subr.mxu0 0.0
    %1561 = vmatpush1.msra.mxu0 0.0
    %1562 = vmatprep.subr.mxu0 0.0
    %1563 = vmatpush1.msra.mxu0 0.0
    %1564 = vmatprep.subr.mxu0 0.0
    %1565 = vmatpush1.msra.mxu0 0.0
    %1566 = vmatprep.subr.mxu0 0.0
    %1567 = vmatpush1.msra.mxu0 0.0
    %1568 = vmatprep.subr.mxu0 0.0
    %1569 = vmatpush1.msra.mxu0 0.0
    %1570 = vmatprep.subr.mxu0 0.0
    %1571 = vmatpush1.msra.mxu0 0.0
    %1572 = vmatprep.subr.mxu0 0.0
    %1573 = vmatpush1.msra.mxu0 0.0
    %1574 = vmatprep.subr.mxu0 0.0
    %1575 = vmatpush1.msra.mxu0 0.0
    %1576 = vmatprep.subr.mxu0 0.0
    %1577 = vmatpush1.msra.mxu0 0.0
    %1578 = vmatprep.mubr.f32.mxu0 0.0
    %1579 = vmatmul.mubr.f32.gmra.mrb[0].mxu0 %v1505
    %v1580 = vpop.f32.mrb[0].mxu0
    %v1581 = vadd.f32 %v1506, %v1580
    %v1582 = vpop.f32.mrb[0].mxu0
    %v1583 = vadd.f32 %v1507, %v1582
    %1584 = vdwg.mxu0
    %1585 = vmatprep.subr.mxu0 %v36
    %1586 = vmatpush1.msra.mxu0 %v35
    %1587 = vmatprep.subr.mxu0 %v40
    %1588 = vmatpush1.msra.mxu0 %v39
    %1589 = vmatprep.subr.mxu0 %v44
    %1590 = vmatpush1.msra.mxu0 %v43
    %1591 = vmatprep.subr.mxu0 %v48
    %1592 = vmatpush1.msra.mxu0 %v47
    %1593 = vmatprep.subr.mxu0 %v52
    %1594 = vmatpush1.msra.mxu0 %v51
    %1595 = vmatprep.subr.mxu0 %v56
    %1596 = vmatpush1.msra.mxu0 %v55
    %1597 = vmatprep.subr.mxu0 %v60
    %1598 = vmatpush1.msra.mxu0 %v59
    %1599 = vmatprep.subr.mxu0 %v64
    %1600 = vmatpush1.msra.mxu0 %v63
    %1601 = vmatprep.subr.mxu0 %v68
    %1602 = vmatpush1.msra.mxu0 %v67
    %1603 = vmatprep.subr.mxu0 %v72
    %1604 = vmatpush1.msra.mxu0 %v71
    %1605 = vmatprep.subr.mxu0 %v76
    %1606 = vmatpush1.msra.mxu0 %v75
    %1607 = vmatprep.subr.mxu0 %v80
    %1608 = vmatpush1.msra.mxu0 %v79
    %1609 = vmatprep.subr.mxu0 %v84
    %1610 = vmatpush1.msra.mxu0 %v83
    %1611 = vmatprep.subr.mxu0 %v88
    %1612 = vmatpush1.msra.mxu0 %v87
    %1613 = vmatprep.subr.mxu0 %v92
    %1614 = vmatpush1.msra.mxu0 %v91
    %1615 = vmatprep.subr.mxu0 %v96
    %1616 = vmatpush1.msra.mxu0 %v95
    %1617 = vmatprep.subr.mxu0 0.0
    %1618 = vmatpush1.msra.mxu0 0.0
    %1619 = vmatprep.subr.mxu0 0.0
    %1620 = vmatpush1.msra.mxu0 0.0
    %1621 = vmatprep.subr.mxu0 0.0
    %1622 = vmatpush1.msra.mxu0 0.0
    %1623 = vmatprep.subr.mxu0 0.0
    %1624 = vmatpush1.msra.mxu0 0.0
    %1625 = vmatprep.subr.mxu0 0.0
    %1626 = vmatpush1.msra.mxu0 0.0
    %1627 = vmatprep.subr.mxu0 0.0
    %1628 = vmatpush1.msra.mxu0 0.0
    %1629 = vmatprep.subr.mxu0 0.0
    %1630 = vmatpush1.msra.mxu0 0.0
    %1631 = vmatprep.subr.mxu0 0.0
    %1632 = vmatpush1.msra.mxu0 0.0
    %1633 = vmatprep.subr.mxu0 0.0
    %1634 = vmatpush1.msra.mxu0 0.0
    %1635 = vmatprep.subr.mxu0 0.0
    %1636 = vmatpush1.msra.mxu0 0.0
    %1637 = vmatprep.subr.mxu0 0.0
    %1638 = vmatpush1.msra.mxu0 0.0
    %1639 = vmatprep.subr.mxu0 0.0
    %1640 = vmatpush1.msra.mxu0 0.0
    %1641 = vmatprep.subr.mxu0 0.0
    %1642 = vmatpush1.msra.mxu0 0.0
    %1643 = vmatprep.subr.mxu0 0.0
    %1644 = vmatpush1.msra.mxu0 0.0
    %1645 = vmatprep.subr.mxu0 0.0
    %1646 = vmatpush1.msra.mxu0 0.0
    %1647 = vmatprep.subr.mxu0 0.0
    %1648 = vmatpush1.msra.mxu0 0.0
    %1649 = vmatprep.mubr.f32.mxu0 0.0
    %1650 = vmatmul.mubr.f32.gmra.mrb[0].mxu0 %v1505
    %v1651 = vpop.f32.mrb[0].mxu0
    %v1652 = vadd.f32 %v1508, %v1651
    %v1653 = vpop.f32.mrb[0].mxu0
    %v1654 = vadd.f32 %v1509, %v1653
    %1655 = vdwg.mxu0
    %v1656 = vxor.u32 %v1581, 2147483648
    %v1657 = vxor.u32 %v1583, 2147483648
    %v1658 = vxor.u32 %v1652, 2147483648
    %v1659 = vmul.f32 %v1656, 1.442695
    %v1660 = vpow.pop %v1659
    %v1661 = vmul.f32 %v1657, 1.442695
    %v1662 = vpow.pop %v1661
    %v1663 = vmul.f32 %v1658, 1.442695
    %v1664 = vpow.pop %v1663
    %v1665 = vadd.f32 %v1660, 1.0
    %v1666 = vadd.f32 %v1662, 1.0
    %v1667 = vadd.f32 %v1664, 1.0
    %v1668 = vrcp.pop %v1665
    %v1669 = vmul.f32 1.0, %v1668
    %v1670 = vrcp.pop %v1666
    %v1671 = vmul.f32 1.0, %v1670
    %v1672 = vrcp.pop %v1667
    %v1673 = vmul.f32 1.0, %v1672
    %v1674 = vtanh.pop %v1654
    %v1675 = vmul.f32 %v1671, %v1503
    %v1676 = vmul.f32 %v1669, %v1674
    %v1677 = vadd.f32 %v1675, %v1676
    %v1678 = vtanh.pop %v1677
    %v1679 = vmul.f32 %v1673, %v1678
    %1680 = vst [vmem:[#allocation5] sm:$0x1] %v1679
    // Predicated region
    $region22: #{tpu_custom_call.1} parent=1 // pred_check
      _
    $region23: #{tpu_custom_call.1} parent=1 // pred_check_branch
      %1682 = sbr.rel (0) target = $region25
    $region24: #{tpu_custom_call.1} parent=1 // pred_region
      %s1684 = ssub.s32 16, 16
      %1685 = vsyncadd [#allocation4], %s1684
      %s1687 = sshll.u32 [#allocation5], 4
      %s1688 = int_to_ptr.vmem [resolvable:$true] %s1687
      %1690 = dma.vmem_to_hbm [thread:$0]  %s1688, 16, %s4, [#allocation4]
    $region25: #{tpu_custom_call.1} parent=1 // pred_fallthru
      _
    // Predicated region
    $region26: #{tpu_custom_call.1} parent=1 // pred_check
      _
    $region27: #{tpu_custom_call.1} parent=1 // pred_check_branch
      %1692 = sbr.rel (0) target = $region29
    $region28: #{tpu_custom_call.1} parent=1 // pred_region
      %1693 = dma.done [#allocation4], 16
    $region29: #{tpu_custom_call.1} parent=1 // pred_fallthru
      _
    %1694 = vsyncpa [#allocation3], 1
    %1695 = vsyncpa [#allocation4], 1

</llo_original>
